<compile_context>
chip_gen: v5e
topology: v5e:2x2
jax: 0.10.0
libtpu: 0.0.40
codegen_flags: <defaults>
</compile_context>

<pallas_src>
import functools

import jax
import jax.numpy as jnp
from jax.experimental import pallas as pl
from jax.experimental.pallas import tpu as pltpu

LANE = 128


def _round_up(x, m):
    return (x + m - 1) // m * m


def seq2seq_decode_kernel(
        tf_ref,                                   # SMEM (T-1,) int32  (scalar prefetch)
        trg_oh_ref,                               # (1, B, V_pad) teacher one-hot row for step i
        ctx_ref,                                  # (B, H_pad)
        emb_ref,                                  # (V_pad, E_pad) embedding table
        w_ih_e_ref, w_ih_c_ref, w_hh_ref,         # (E_pad,3H_pad), (H_pad,3H_pad), (H_pad,3H_pad)
        b_ih_ref, b_hh_ref,                       # (1, 3H_pad)
        w_fc_e_ref, w_fc_h_ref, w_fc_c_ref,       # (E_pad,V_pad), (H_pad,V_pad), (H_pad,V_pad)
        b_fc_ref,                                 # (1, V_pad)
        pred_ref,                                 # out (1, B, V_pad)
        h_scr, oh_scr):                           # scratch (B, H_pad), (B, V_pad)
    i = pl.program_id(0)
    h_pad = h_scr.shape[1]
    v_pad = oh_scr.shape[1]

    @pl.when(i == 0)
    def _init():
        h_scr[...] = ctx_ref[...]            # hidden starts equal to context
        oh_scr[...] = jnp.zeros_like(oh_scr)

    ctx = ctx_ref[...]
    h = h_scr[...]

    # Input token selection: teacher-forced row (always at step 0) vs previous greedy argmax.
    use_teacher = jnp.logical_or(i == 0, tf_ref[i] == 1).astype(jnp.float32)
    onehot = use_teacher * trg_oh_ref[0] + (1.0 - use_teacher) * oh_scr[...]   # (B, V_pad)

    # embedded = dropout(Embedding(input)); dropout is inference-mode identity.
    # Embedding lookup as a one-hot matmul -> pure MXU, no in-kernel gather.
    emb = jnp.dot(onehot, emb_ref[...], preferred_element_type=jnp.float32)    # (B, E_pad)

    # GRU step.  emb_con = cat(emb, ctx) realised as split matmuls (no lane concat).
    gi = (jnp.dot(emb, w_ih_e_ref[...], preferred_element_type=jnp.float32)
          + jnp.dot(ctx, w_ih_c_ref[...], preferred_element_type=jnp.float32)
          + b_ih_ref[...])
    gh = jnp.dot(h, w_hh_ref[...], preferred_element_type=jnp.float32) + b_hh_ref[...]

    # Gate-blocked layout: each gate occupies a full 128-lane block -> whole-vreg slices.
    r = jax.nn.sigmoid(gi[:, 0:h_pad] + gh[:, 0:h_pad])
    z = jax.nn.sigmoid(gi[:, h_pad:2 * h_pad] + gh[:, h_pad:2 * h_pad])
    n = jnp.tanh(gi[:, 2 * h_pad:3 * h_pad] + r * gh[:, 2 * h_pad:3 * h_pad])
    h_new = (1.0 - z) * n + z * h

    # prediction = fc_out(cat(emb, hidden, ctx)) as split matmuls.
    pred = (jnp.dot(emb, w_fc_e_ref[...], preferred_element_type=jnp.float32)
            + jnp.dot(h_new, w_fc_h_ref[...], preferred_element_type=jnp.float32)
            + jnp.dot(ctx, w_fc_c_ref[...], preferred_element_type=jnp.float32)
            + b_fc_ref[...])

    pred_ref[0] = pred
    h_scr[...] = h_new

    # Greedy argmax -> one-hot carried to the next step (used when not teacher-forced).
    # Padded vocab lanes carry a -1e30 bias so they can never win.
    col = jax.lax.broadcasted_iota(jnp.int32, pred.shape, 1)
    mx = jnp.max(pred, axis=1, keepdims=True)
    amax = jnp.min(jnp.where(pred == mx, col, v_pad), axis=1, keepdims=True)
    oh_scr[...] = (col == amax).astype(jnp.float32)


def prepare_decoder_params(params):
    """One-time weight prep (hoisted out of the per-sequence path): transpose, split the
    concat-inputs into per-operand blocks, pad to 128 lanes, gate-block the GRU weights."""
    emb = params["emb_table"]
    O, E = emb.shape
    H = params["w_hh"].shape[1]
    V_pad, E_pad, H_pad = _round_up(O, LANE), _round_up(E, LANE), _round_up(H, LANE)

    emb_p = jnp.zeros((V_pad, E_pad), jnp.float32).at[:O, :E].set(emb)

    def gate_block(w_t, k, k_pad):
        # w_t: (k, 3H) with gates [r|z|n] -> (k_pad, 3*H_pad), gate g at cols [g*H_pad, g*H_pad+H)
        out = jnp.zeros((k_pad, 3 * H_pad), jnp.float32)
        for g in range(3):
            out = out.at[:k, g * H_pad:g * H_pad + H].set(w_t[:, g * H:(g + 1) * H])
        return out

    def gate_block_bias(b):
        out = jnp.zeros((1, 3 * H_pad), jnp.float32)
        for g in range(3):
            out = out.at[0, g * H_pad:g * H_pad + H].set(b[g * H:(g + 1) * H])
        return out

    w_ih, w_hh, w_fc = params["w_ih"], params["w_hh"], params["w_fc"]
    return {
        "emb_table": emb_p,
        "w_ih_e": gate_block(w_ih[:, :E].T, E, E_pad),
        "w_ih_c": gate_block(w_ih[:, E:].T, H, H_pad),
        "w_hh": gate_block(w_hh.T, H, H_pad),
        "b_ih": gate_block_bias(params["b_ih"]),
        "b_hh": gate_block_bias(params["b_hh"]),
        "w_fc_e": jnp.zeros((E_pad, V_pad), jnp.float32).at[:E, :O].set(w_fc[:, :E].T),
        "w_fc_h": jnp.zeros((H_pad, V_pad), jnp.float32).at[:H, :O].set(w_fc[:, E:E + H].T),
        "w_fc_c": jnp.zeros((H_pad, V_pad), jnp.float32).at[:H, :O].set(w_fc[:, E + H:].T),
        # Padded logit lanes get a large negative bias so the in-kernel greedy argmax never
        # selects a padded column; padding is sliced off after the call.
        "b_fc": jnp.full((1, V_pad), -1e30, jnp.float32).at[0, :O].set(params["b_fc"]),
    }


@functools.partial(jax.jit, static_argnames=("output_dim",))
def seq2seq_forward(trg, context, tf_mask, prepped, *, output_dim):
    """trg: (T, B) int32; context: (1, B, H) f32; tf_mask: (T,) bool.
    Returns outputs: (T, B, output_dim) with outputs[0] == 0 (as in the PyTorch module)."""
    T, B = trg.shape
    H = context.shape[-1]
    V_pad, E_pad = prepped["emb_table"].shape
    H_pad = prepped["w_hh"].shape[0]
    g3 = 3 * H_pad
    steps = T - 1

    ctx_p = jnp.zeros((B, H_pad), jnp.float32).at[:, :H].set(context[0])
    trg_oh = jax.nn.one_hot(trg[:steps], V_pad, dtype=jnp.float32)     # (steps, B, V_pad)
    tf = tf_mask[:steps].astype(jnp.int32)                             # tf[i]: teacher-force at step i

    flops_step = 2 * B * (V_pad * E_pad + E_pad * g3 + 2 * H_pad * g3
                          + E_pad * V_pad + 2 * H_pad * V_pad)
    weight_bytes = 4 * (V_pad * E_pad + E_pad * g3 + 2 * H_pad * g3 + 2 * g3
                        + E_pad * V_pad + 2 * H_pad * V_pad + V_pad + B * H_pad)
    cost = pl.CostEstimate(
        flops=steps * flops_step,
        transcendentals=steps * 3 * B * H_pad,
        bytes_accessed=weight_bytes + steps * 4 * 2 * B * V_pad)

    grid_spec = pltpu.PrefetchScalarGridSpec(
        num_scalar_prefetch=1,
        grid=(steps,),
        in_specs=[
            pl.BlockSpec((1, B, V_pad), lambda i, tf: (i, 0, 0)),      # teacher one-hot row
            pl.BlockSpec((B, H_pad), lambda i, tf: (0, 0)),            # context (resident)
            pl.BlockSpec((V_pad, E_pad), lambda i, tf: (0, 0)),        # embedding table
            pl.BlockSpec((E_pad, g3), lambda i, tf: (0, 0)),           # W_ih (emb part)
            pl.BlockSpec((H_pad, g3), lambda i, tf: (0, 0)),           # W_ih (ctx part)
            pl.BlockSpec((H_pad, g3), lambda i, tf: (0, 0)),           # W_hh
            pl.BlockSpec((1, g3), lambda i, tf: (0, 0)),               # b_ih
            pl.BlockSpec((1, g3), lambda i, tf: (0, 0)),               # b_hh
            pl.BlockSpec((E_pad, V_pad), lambda i, tf: (0, 0)),        # W_fc (emb part)
            pl.BlockSpec((H_pad, V_pad), lambda i, tf: (0, 0)),        # W_fc (hidden part)
            pl.BlockSpec((H_pad, V_pad), lambda i, tf: (0, 0)),        # W_fc (ctx part)
            pl.BlockSpec((1, V_pad), lambda i, tf: (0, 0)),            # b_fc
        ],
        out_specs=pl.BlockSpec((1, B, V_pad), lambda i, tf: (i, 0, 0)),
        scratch_shapes=[pltpu.VMEM((B, H_pad), jnp.float32),           # carried hidden state
                        pltpu.VMEM((B, V_pad), jnp.float32)],          # carried greedy one-hot
    )

    preds_pad = pl.pallas_call(
        seq2seq_decode_kernel,
        out_shape=jax.ShapeDtypeStruct((steps, B, V_pad), jnp.float32),
        grid_spec=grid_spec,
        compiler_params=pltpu.CompilerParams(
            dimension_semantics=("arbitrary",),        # time axis carries state: sequential
            vmem_limit_bytes=32 * 1024 * 1024),
        cost_estimate=cost,
    )(tf, trg_oh, ctx_p,
      prepped["emb_table"], prepped["w_ih_e"], prepped["w_ih_c"], prepped["w_hh"],
      prepped["b_ih"], prepped["b_hh"],
      prepped["w_fc_e"], prepped["w_fc_h"], prepped["w_fc_c"], prepped["b_fc"])

    preds = preds_pad[:, :, :output_dim]                               # drop lane padding
    return jnp.concatenate(
        [jnp.zeros((1, B, output_dim), jnp.float32), preds], axis=0)   # outputs[0] stays zero


def reference_forward(trg, context, tf_mask, params):
    """Pure-JAX mirror of the PyTorch Seq2Seq loop (GRU decoder, greedy top1 feedback)."""
    T, B = trg.shape
    O = params["w_fc"].shape[0]
    H = params["w_hh"].shape[1]
    hidden = context[0]
    ctx = context[0]
    inp = trg[0]
    outputs = [jnp.zeros((B, O), jnp.float32)]
    for t in range(1, T):
        embedded = params["emb_table"][inp]
        x = jnp.concatenate([embedded, ctx], axis=1)
        gi = x @ params["w_ih"].T + params["b_ih"]
        gh = hidden @ params["w_hh"].T + params["b_hh"]
        r = jax.nn.sigmoid(gi[:, :H] + gh[:, :H])
        z = jax.nn.sigmoid(gi[:, H:2 * H] + gh[:, H:2 * H])
        n = jnp.tanh(gi[:, 2 * H:] + r * gh[:, 2 * H:])
        hidden = (1.0 - z) * n + z * hidden
        out = jnp.concatenate([embedded, hidden, ctx], axis=1)
        pred = out @ params["w_fc"].T + params["b_fc"]
        outputs.append(pred)
        top1 = jnp.argmax(pred, axis=1).astype(trg.dtype)
        inp = jnp.where(tf_mask[t], trg[t], top1)
    return jnp.stack(outputs, axis=0)


def init_params(key, output_dim, emb_dim, hid_dim):
    ks = jax.random.split(key, 7)
    s = 0.1
    return {
        "emb_table": s * jax.random.normal(ks[0], (output_dim, emb_dim), jnp.float32),
        "w_ih": s * jax.random.normal(ks[1], (3 * hid_dim, emb_dim + hid_dim), jnp.float32),
        "w_hh": s * jax.random.normal(ks[2], (3 * hid_dim, hid_dim), jnp.float32),
        "b_ih": s * jax.random.normal(ks[3], (3 * hid_dim,), jnp.float32),
        "b_hh": s * jax.random.normal(ks[4], (3 * hid_dim,), jnp.float32),
        "w_fc": s * jax.random.normal(ks[5], (output_dim, emb_dim + 2 * hid_dim), jnp.float32),
        "b_fc": s * jax.random.normal(ks[6], (output_dim,), jnp.float32),
    }


if __name__ == "__main__":
    OUTPUT_DIM = 50    # vocab size
    EMB_DIM = 32
    HID_DIM = 32
    BATCH = 2
    TRG_LEN = 8

    key = jax.random.PRNGKey(0)
    k_trg, k_ctx, k_tf, k_par = jax.random.split(key, 4)

    trg = jax.random.randint(k_trg, (TRG_LEN, BATCH), 0, OUTPUT_DIM, dtype=jnp.int32)
    context = jax.random.normal(k_ctx, (1, BATCH, HID_DIM), jnp.float32)
    # teacher_forcing_ratio=0.5 realised as a precomputed Bernoulli mask (PyTorch draws
    # python random.random() per step; we fix the draws so kernel and reference agree).
    tf_mask = jax.random.bernoulli(k_tf, 0.5, (TRG_LEN,))
    params = init_params(k_par, OUTPUT_DIM, EMB_DIM, HID_DIM)

    prepped = prepare_decoder_params(params)   # one-time weight prep (hoisted out of decode)

    outputs = seq2seq_forward(trg, context, tf_mask, prepped, output_dim=OUTPUT_DIM)
    jax.block_until_ready(outputs)

    ref = reference_forward(trg, context, tf_mask, params)

    assert outputs.shape == (TRG_LEN, BATCH, OUTPUT_DIM)
    assert jnp.allclose(outputs, ref, atol=2e-3, rtol=2e-3), (
        "max |diff| = " + str(float(jnp.max(jnp.abs(outputs - ref)))))

    print("KERNEL_OK")
</pallas_src>

<mosaic_0001>
module attributes {stable_mosaic.version = 11 : i64} {
  func.func @seq2seq_decode_kernel(%arg0: i32, %arg1: memref<7xi32, #tpu.memory_space<smem>>, %arg2: memref<1x2x128xf32, #tpu.memory_space<vmem>>, %arg3: memref<2x128xf32, #tpu.memory_space<vmem>>, %arg4: memref<128x128xf32, #tpu.memory_space<vmem>>, %arg5: memref<128x384xf32, #tpu.memory_space<vmem>>, %arg6: memref<128x384xf32, #tpu.memory_space<vmem>>, %arg7: memref<128x384xf32, #tpu.memory_space<vmem>>, %arg8: memref<1x384xf32, #tpu.memory_space<vmem>>, %arg9: memref<1x384xf32, #tpu.memory_space<vmem>>, %arg10: memref<128x128xf32, #tpu.memory_space<vmem>>, %arg11: memref<128x128xf32, #tpu.memory_space<vmem>>, %arg12: memref<128x128xf32, #tpu.memory_space<vmem>>, %arg13: memref<1x128xf32, #tpu.memory_space<vmem>>, %arg14: memref<1x2x128xf32, #tpu.memory_space<vmem>>, %arg15: memref<2x128xf32, #tpu.memory_space<vmem>>, %arg16: memref<2x128xf32, #tpu.memory_space<vmem>>) attributes {dimension_semantics = [#tpu.dimension_semantics<arbitrary>], iteration_bounds = array<i64: 7>, scalar_prefetch = 1 : i64, scratch_operands = 2 : i64, tpu.core_type = #tpu.core_type<tc>, window_params = [{transform_indices = @transform_0, window_bounds = array<i64: 1, 2, 128>}, {pipeline_mode = #tpu.pipeline_mode<synchronous>, transform_indices = @transform_1, window_bounds = array<i64: 2, 128>}, {pipeline_mode = #tpu.pipeline_mode<synchronous>, transform_indices = @transform_2, window_bounds = array<i64: 128, 128>}, {pipeline_mode = #tpu.pipeline_mode<synchronous>, transform_indices = @transform_3, window_bounds = array<i64: 128, 384>}, {pipeline_mode = #tpu.pipeline_mode<synchronous>, transform_indices = @transform_4, window_bounds = array<i64: 128, 384>}, {pipeline_mode = #tpu.pipeline_mode<synchronous>, transform_indices = @transform_5, window_bounds = array<i64: 128, 384>}, {pipeline_mode = #tpu.pipeline_mode<synchronous>, transform_indices = @transform_6, window_bounds = array<i64: 1, 384>}, {pipeline_mode = #tpu.pipeline_mode<synchronous>, transform_indices = @transform_7, window_bounds = array<i64: 1, 384>}, {pipeline_mode = #tpu.pipeline_mode<synchronous>, transform_indices = @transform_8, window_bounds = array<i64: 128, 128>}, {pipeline_mode = #tpu.pipeline_mode<synchronous>, transform_indices = @transform_9, window_bounds = array<i64: 128, 128>}, {pipeline_mode = #tpu.pipeline_mode<synchronous>, transform_indices = @transform_10, window_bounds = array<i64: 128, 128>}, {pipeline_mode = #tpu.pipeline_mode<synchronous>, transform_indices = @transform_11, window_bounds = array<i64: 1, 128>}, {transform_indices = @transform_12, window_bounds = array<i64: 1, 2, 128>}]} {
    %c0_i32 = arith.constant 0 : i32
    %0 = arith.cmpi eq, %arg0, %c0_i32 : i32
    %1 = arith.extui %0 : i1 to i32
    %c0_i32_0 = arith.constant 0 : i32
    %2 = arith.cmpi ne, %1, %c0_i32_0 : i32
    scf.if %2 {
      %c0_49 = arith.constant 0 : index
      %c0_50 = arith.constant 0 : index
      %91 = vector.load %arg3[%c0_49, %c0_50] : memref<2x128xf32, #tpu.memory_space<vmem>>, vector<2x128xf32>
      %c0_51 = arith.constant 0 : index
      %c0_52 = arith.constant 0 : index
      %92 = vector.load %arg15[%c0_51, %c0_52] : memref<2x128xf32, #tpu.memory_space<vmem>>, vector<2x128xf32>
      tpu.vector_store %arg15[%c0_51, %c0_52], %91 {strides = array<i32>} : memref<2x128xf32, #tpu.memory_space<vmem>>, vector<2x128xf32>,
      %cst_53 = arith.constant 0.000000e+00 : f32
      %93 = vector.broadcast %cst_53 : f32 to vector<2x128xf32>
      %c0_54 = arith.constant 0 : index
      %c0_55 = arith.constant 0 : index
      %94 = vector.load %arg16[%c0_54, %c0_55] : memref<2x128xf32, #tpu.memory_space<vmem>>, vector<2x128xf32>
      tpu.vector_store %arg16[%c0_54, %c0_55], %93 {strides = array<i32>} : memref<2x128xf32, #tpu.memory_space<vmem>>, vector<2x128xf32>,
    } else {
    }
    %c0 = arith.constant 0 : index
    %c0_1 = arith.constant 0 : index
    %3 = vector.load %arg3[%c0, %c0_1] : memref<2x128xf32, #tpu.memory_space<vmem>>, vector<2x128xf32>
    %c0_2 = arith.constant 0 : index
    %c0_3 = arith.constant 0 : index
    %4 = vector.load %arg15[%c0_2, %c0_3] : memref<2x128xf32, #tpu.memory_space<vmem>>, vector<2x128xf32>
    %c0_i32_4 = arith.constant 0 : i32
    %5 = arith.cmpi eq, %arg0, %c0_i32_4 : i32
    %6 = arith.index_cast %arg0 : i32 to index
    %7 = memref.load %arg1[%6] : memref<7xi32, #tpu.memory_space<smem>>
    %c1_i32 = arith.constant 1 : i32
    %8 = arith.cmpi eq, %7, %c1_i32 : i32
    %9 = arith.ori %5, %8 : i1
    %10 = arith.extui %9 : i1 to i32
    %11 = arith.sitofp %10 : i32 to f32
    %c0_5 = arith.constant 0 : index
    %c0_6 = arith.constant 0 : index
    %c0_7 = arith.constant 0 : index
    %12 = vector.load %arg2[%c0_5, %c0_6, %c0_7] : memref<1x2x128xf32, #tpu.memory_space<vmem>>, vector<1x2x128xf32>
    %13 = vector.shape_cast %12 : vector<1x2x128xf32> to vector<2x128xf32>
    %14 = vector.broadcast %11 : f32 to vector<2x128xf32>
    %15 = arith.mulf %14, %13 : vector<2x128xf32>
    %cst = arith.constant 1.000000e+00 : f32
    %16 = arith.subf %cst, %11 : f32
    %c0_8 = arith.constant 0 : index
    %c0_9 = arith.constant 0 : index
    %17 = vector.load %arg16[%c0_8, %c0_9] : memref<2x128xf32, #tpu.memory_space<vmem>>, vector<2x128xf32>
    %18 = vector.broadcast %16 : f32 to vector<2x128xf32>
    %19 = arith.mulf %18, %17 : vector<2x128xf32>
    %20 = arith.addf %15, %19 : vector<2x128xf32>
    %c0_10 = arith.constant 0 : index
    %c0_11 = arith.constant 0 : index
    %21 = vector.load %arg4[%c0_10, %c0_11] : memref<128x128xf32, #tpu.memory_space<vmem>>, vector<128x128xf32>
    %cst_12 = arith.constant dense<0.000000e+00> : vector<2x128xf32>
    %22 = tpu.matmul %20, %21, %cst_12 {dimension_numbers = #tpu.dot_dimension_numbers<[1], [0], [0], [1], [0, 0, 1, 1], [], []>} : vector<2x128xf32>, vector<128x128xf32>, vector<2x128xf32> -> vector<2x128xf32>
    %c0_13 = arith.constant 0 : index
    %c0_14 = arith.constant 0 : index
    %23 = vector.load %arg5[%c0_13, %c0_14] : memref<128x384xf32, #tpu.memory_space<vmem>>, vector<128x384xf32>
    %cst_15 = arith.constant dense<0.000000e+00> : vector<2x384xf32>
    %24 = tpu.matmul %22, %23, %cst_15 {dimension_numbers = #tpu.dot_dimension_numbers<[1], [0], [0], [1], [0, 0, 1, 1], [], []>} : vector<2x128xf32>, vector<128x384xf32>, vector<2x384xf32> -> vector<2x384xf32>
    %c0_16 = arith.constant 0 : index
    %c0_17 = arith.constant 0 : index
    %25 = vector.load %arg6[%c0_16, %c0_17] : memref<128x384xf32, #tpu.memory_space<vmem>>, vector<128x384xf32>
    %cst_18 = arith.constant dense<0.000000e+00> : vector<2x384xf32>
    %26 = tpu.matmul %3, %25, %cst_18 {dimension_numbers = #tpu.dot_dimension_numbers<[1], [0], [0], [1], [0, 0, 1, 1], [], []>} : vector<2x128xf32>, vector<128x384xf32>, vector<2x384xf32> -> vector<2x384xf32>
    %27 = arith.addf %24, %26 : vector<2x384xf32>
    %c0_19 = arith.constant 0 : index
    %c0_20 = arith.constant 0 : index
    %28 = vector.load %arg8[%c0_19, %c0_20] : memref<1x384xf32, #tpu.memory_space<vmem>>, vector<1x384xf32>
    %29 = vector.broadcast %28 : vector<1x384xf32> to vector<2x384xf32>
    %30 = arith.addf %27, %29 : vector<2x384xf32>
    %c0_21 = arith.constant 0 : index
    %c0_22 = arith.constant 0 : index
    %31 = vector.load %arg7[%c0_21, %c0_22] : memref<128x384xf32, #tpu.memory_space<vmem>>, vector<128x384xf32>
    %cst_23 = arith.constant dense<0.000000e+00> : vector<2x384xf32>
    %32 = tpu.matmul %4, %31, %cst_23 {dimension_numbers = #tpu.dot_dimension_numbers<[1], [0], [0], [1], [0, 0, 1, 1], [], []>} : vector<2x128xf32>, vector<128x384xf32>, vector<2x384xf32> -> vector<2x384xf32>
    %c0_24 = arith.constant 0 : index
    %c0_25 = arith.constant 0 : index
    %33 = vector.load %arg9[%c0_24, %c0_25] : memref<1x384xf32, #tpu.memory_space<vmem>>, vector<1x384xf32>
    %34 = vector.broadcast %33 : vector<1x384xf32> to vector<2x384xf32>
    %35 = arith.addf %32, %34 : vector<2x384xf32>
    %36 = vector.extract_strided_slice %30 {offsets = [0, 0], sizes = [2, 128], strides = [1, 1]} : vector<2x384xf32> to vector<2x128xf32>
    %37 = vector.extract_strided_slice %35 {offsets = [0, 0], sizes = [2, 128], strides = [1, 1]} : vector<2x384xf32> to vector<2x128xf32>
    %38 = arith.addf %36, %37 : vector<2x128xf32>
    %39 = arith.negf %38 : vector<2x128xf32>
    %40 = math.exp %39 : vector<2x128xf32>
    %cst_26 = arith.constant 1.000000e+00 : f32
    %41 = vector.broadcast %cst_26 : f32 to vector<2x128xf32>
    %42 = arith.addf %41, %40 : vector<2x128xf32>
    %43 = arith.divf %41, %42 : vector<2x128xf32>
    %44 = vector.extract_strided_slice %30 {offsets = [0, 128], sizes = [2, 128], strides = [1, 1]} : vector<2x384xf32> to vector<2x128xf32>
    %45 = vector.extract_strided_slice %35 {offsets = [0, 128], sizes = [2, 128], strides = [1, 1]} : vector<2x384xf32> to vector<2x128xf32>
    %46 = arith.addf %44, %45 : vector<2x128xf32>
    %47 = arith.negf %46 : vector<2x128xf32>
    %48 = math.exp %47 : vector<2x128xf32>
    %cst_27 = arith.constant 1.000000e+00 : f32
    %49 = vector.broadcast %cst_27 : f32 to vector<2x128xf32>
    %50 = arith.addf %49, %48 : vector<2x128xf32>
    %51 = arith.divf %49, %50 : vector<2x128xf32>
    %52 = vector.extract_strided_slice %30 {offsets = [0, 256], sizes = [2, 128], strides = [1, 1]} : vector<2x384xf32> to vector<2x128xf32>
    %53 = vector.extract_strided_slice %35 {offsets = [0, 256], sizes = [2, 128], strides = [1, 1]} : vector<2x384xf32> to vector<2x128xf32>
    %54 = arith.mulf %43, %53 : vector<2x128xf32>
    %55 = arith.addf %52, %54 : vector<2x128xf32>
    %56 = math.tanh %55 : vector<2x128xf32>
    %cst_28 = arith.constant 1.000000e+00 : f32
    %57 = vector.broadcast %cst_28 : f32 to vector<2x128xf32>
    %58 = arith.subf %57, %51 : vector<2x128xf32>
    %59 = arith.mulf %58, %56 : vector<2x128xf32>
    %60 = arith.mulf %51, %4 : vector<2x128xf32>
    %61 = arith.addf %59, %60 : vector<2x128xf32>
    %c0_29 = arith.constant 0 : index
    %c0_30 = arith.constant 0 : index
    %62 = vector.load %arg10[%c0_29, %c0_30] : memref<128x128xf32, #tpu.memory_space<vmem>>, vector<128x128xf32>
    %cst_31 = arith.constant dense<0.000000e+00> : vector<2x128xf32>
    %63 = tpu.matmul %22, %62, %cst_31 {dimension_numbers = #tpu.dot_dimension_numbers<[1], [0], [0], [1], [0, 0, 1, 1], [], []>} : vector<2x128xf32>, vector<128x128xf32>, vector<2x128xf32> -> vector<2x128xf32>
    %c0_32 = arith.constant 0 : index
    %c0_33 = arith.constant 0 : index
    %64 = vector.load %arg11[%c0_32, %c0_33] : memref<128x128xf32, #tpu.memory_space<vmem>>, vector<128x128xf32>
    %cst_34 = arith.constant dense<0.000000e+00> : vector<2x128xf32>
    %65 = tpu.matmul %61, %64, %cst_34 {dimension_numbers = #tpu.dot_dimension_numbers<[1], [0], [0], [1], [0, 0, 1, 1], [], []>} : vector<2x128xf32>, vector<128x128xf32>, vector<2x128xf32> -> vector<2x128xf32>
    %66 = arith.addf %63, %65 : vector<2x128xf32>
    %c0_35 = arith.constant 0 : index
    %c0_36 = arith.constant 0 : index
    %67 = vector.load %arg12[%c0_35, %c0_36] : memref<128x128xf32, #tpu.memory_space<vmem>>, vector<128x128xf32>
    %cst_37 = arith.constant dense<0.000000e+00> : vector<2x128xf32>
    %68 = tpu.matmul %3, %67, %cst_37 {dimension_numbers = #tpu.dot_dimension_numbers<[1], [0], [0], [1], [0, 0, 1, 1], [], []>} : vector<2x128xf32>, vector<128x128xf32>, vector<2x128xf32> -> vector<2x128xf32>
    %69 = arith.addf %66, %68 : vector<2x128xf32>
    %c0_38 = arith.constant 0 : index
    %c0_39 = arith.constant 0 : index
    %70 = vector.load %arg13[%c0_38, %c0_39] : memref<1x128xf32, #tpu.memory_space<vmem>>, vector<1x128xf32>
    %71 = vector.broadcast %70 : vector<1x128xf32> to vector<2x128xf32>
    %72 = arith.addf %69, %71 : vector<2x128xf32>
    %c0_40 = arith.constant 0 : index
    %c0_41 = arith.constant 0 : index
    %c0_42 = arith.constant 0 : index
    %73 = vector.load %arg14[%c0_40, %c0_41, %c0_42] : memref<1x2x128xf32, #tpu.memory_space<vmem>>, vector<1x2x128xf32>
    %74 = vector.shape_cast %73 : vector<1x2x128xf32> to vector<2x128xf32>
    %75 = vector.shape_cast %72 : vector<2x128xf32> to vector<1x2x128xf32>
    tpu.vector_store %arg14[%c0_40, %c0_41, %c0_42], %75 {strides = array<i32>} : memref<1x2x128xf32, #tpu.memory_space<vmem>>, vector<1x2x128xf32>,
    %c0_43 = arith.constant 0 : index
    %c0_44 = arith.constant 0 : index
    %76 = vector.load %arg15[%c0_43, %c0_44] : memref<2x128xf32, #tpu.memory_space<vmem>>, vector<2x128xf32>
    tpu.vector_store %arg15[%c0_43, %c0_44], %61 {strides = array<i32>} : memref<2x128xf32, #tpu.memory_space<vmem>>, vector<2x128xf32>,
    %77 = tpu.iota {dimensions = array<i32: 1>} : vector<2x128xi32>
    %cst_45 = arith.constant dense<0xFF800000> : vector<2xf32>
    %78 = vector.multi_reduction <maximumf>, %72, %cst_45 [1] : vector<2x128xf32> to vector<2xf32>
    %79 = vector.shape_cast %78 : vector<2xf32> to vector<2x1xf32>
    %80 = vector.broadcast %79 : vector<2x1xf32> to vector<2x128xf32>
    %81 = arith.cmpf oeq, %72, %80 : vector<2x128xf32>
    %c128_i32 = arith.constant 128 : i32
    %82 = vector.broadcast %c128_i32 : i32 to vector<2x128xi32>
    %83 = arith.select %81, %77, %82 : vector<2x128xi1>, vector<2x128xi32>
    %cst_46 = arith.constant dense<2147483647> : vector<2xi32>
    %84 = vector.multi_reduction <minsi>, %83, %cst_46 [1] : vector<2x128xi32> to vector<2xi32>
    %85 = vector.shape_cast %84 : vector<2xi32> to vector<2x1xi32>
    %86 = vector.broadcast %85 : vector<2x1xi32> to vector<2x128xi32>
    %87 = arith.cmpi eq, %77, %86 : vector<2x128xi32>
    %88 = arith.extui %87 : vector<2x128xi1> to vector<2x128xi32>
    %89 = arith.sitofp %88 : vector<2x128xi32> to vector<2x128xf32>
    %c0_47 = arith.constant 0 : index
    %c0_48 = arith.constant 0 : index
    %90 = vector.load %arg16[%c0_47, %c0_48] : memref<2x128xf32, #tpu.memory_space<vmem>>, vector<2x128xf32>
    tpu.vector_store %arg16[%c0_47, %c0_48], %89 {strides = array<i32>} : memref<2x128xf32, #tpu.memory_space<vmem>>, vector<2x128xf32>,
    return
  }
  func.func @transform_0(%arg0: i32, %arg1: memref<7xi32, #tpu.memory_space<smem>>) -> (i32, i32, i32) {
    %c0_i32 = arith.constant 0 : i32
    %c0_i32_0 = arith.constant 0 : i32
    %c0_i32_1 = arith.constant 0 : i32
    return %arg0, %c0_i32, %c0_i32_0 : i32, i32, i32
  }
  func.func @transform_1(%arg0: i32, %arg1: memref<7xi32, #tpu.memory_space<smem>>) -> (i32, i32) {
    %c0_i32 = arith.constant 0 : i32
    %c0_i32_0 = arith.constant 0 : i32
    %c0_i32_1 = arith.constant 0 : i32
    return %c0_i32, %c0_i32_0 : i32, i32
  }
  func.func @transform_2(%arg0: i32, %arg1: memref<7xi32, #tpu.memory_space<smem>>) -> (i32, i32) {
    %c0_i32 = arith.constant 0 : i32
    %c0_i32_0 = arith.constant 0 : i32
    %c0_i32_1 = arith.constant 0 : i32
    return %c0_i32, %c0_i32_0 : i32, i32
  }
  func.func @transform_3(%arg0: i32, %arg1: memref<7xi32, #tpu.memory_space<smem>>) -> (i32, i32) {
    %c0_i32 = arith.constant 0 : i32
    %c0_i32_0 = arith.constant 0 : i32
    %c0_i32_1 = arith.constant 0 : i32
    return %c0_i32, %c0_i32_0 : i32, i32
  }
  func.func @transform_4(%arg0: i32, %arg1: memref<7xi32, #tpu.memory_space<smem>>) -> (i32, i32) {
    %c0_i32 = arith.constant 0 : i32
    %c0_i32_0 = arith.constant 0 : i32
    %c0_i32_1 = arith.constant 0 : i32
    return %c0_i32, %c0_i32_0 : i32, i32
  }
  func.func @transform_5(%arg0: i32, %arg1: memref<7xi32, #tpu.memory_space<smem>>) -> (i32, i32) {
    %c0_i32 = arith.constant 0 : i32
    %c0_i32_0 = arith.constant 0 : i32
    %c0_i32_1 = arith.constant 0 : i32
    return %c0_i32, %c0_i32_0 : i32, i32
  }
  func.func @transform_6(%arg0: i32, %arg1: memref<7xi32, #tpu.memory_space<smem>>) -> (i32, i32) {
    %c0_i32 = arith.constant 0 : i32
    %c0_i32_0 = arith.constant 0 : i32
    %c0_i32_1 = arith.constant 0 : i32
    return %c0_i32, %c0_i32_0 : i32, i32
  }
  func.func @transform_7(%arg0: i32, %arg1: memref<7xi32, #tpu.memory_space<smem>>) -> (i32, i32) {
    %c0_i32 = arith.constant 0 : i32
    %c0_i32_0 = arith.constant 0 : i32
    %c0_i32_1 = arith.constant 0 : i32
    return %c0_i32, %c0_i32_0 : i32, i32
  }
  func.func @transform_8(%arg0: i32, %arg1: memref<7xi32, #tpu.memory_space<smem>>) -> (i32, i32) {
    %c0_i32 = arith.constant 0 : i32
    %c0_i32_0 = arith.constant 0 : i32
    %c0_i32_1 = arith.constant 0 : i32
    return %c0_i32, %c0_i32_0 : i32, i32
  }
  func.func @transform_9(%arg0: i32, %arg1: memref<7xi32, #tpu.memory_space<smem>>) -> (i32, i32) {
    %c0_i32 = arith.constant 0 : i32
    %c0_i32_0 = arith.constant 0 : i32
    %c0_i32_1 = arith.constant 0 : i32
    return %c0_i32, %c0_i32_0 : i32, i32
  }
  func.func @transform_10(%arg0: i32, %arg1: memref<7xi32, #tpu.memory_space<smem>>) -> (i32, i32) {
    %c0_i32 = arith.constant 0 : i32
    %c0_i32_0 = arith.constant 0 : i32
    %c0_i32_1 = arith.constant 0 : i32
    return %c0_i32, %c0_i32_0 : i32, i32
  }
  func.func @transform_11(%arg0: i32, %arg1: memref<7xi32, #tpu.memory_space<smem>>) -> (i32, i32) {
    %c0_i32 = arith.constant 0 : i32
    %c0_i32_0 = arith.constant 0 : i32
    %c0_i32_1 = arith.constant 0 : i32
    return %c0_i32, %c0_i32_0 : i32, i32
  }
  func.func @transform_12(%arg0: i32, %arg1: memref<7xi32, #tpu.memory_space<smem>>) -> (i32, i32, i32) {
    %c0_i32 = arith.constant 0 : i32
    %c0_i32_0 = arith.constant 0 : i32
    %c0_i32_1 = arith.constant 0 : i32
    return %arg0, %c0_i32, %c0_i32_0 : i32, i32, i32
  }
}

</mosaic_0001>

<llo_original>
// kernel: seq2seq_forward.1
$region0: #{seq2seq_forward.1}
  #allocation0 [shape = 'u32[]', space=smem, size = 0x4, offset = 0x4, fixed_abs, tag = 'smem constant byte address 0x4 - core index']
  #allocation1 [shape = 'u32[72,128]{1,0:T(1,128)}', space=vmem, size = 0x9000, scoped, tag = 'internal scratch']
  #allocation2 [shape = 'f32[2,128]{1,0:T(2,128)}', space=vmem, size = 0x400, scoped, tag = 'scratch operand']
  #allocation3 [shape = 'f32[2,128]{1,0:T(2,128)}', space=vmem, size = 0x400, scoped, tag = 'scratch operand']
  #allocation4 [shape = 's32[1]{0}', space=sflag, size = 0x4, scoped, tag = 'scoped memory for seq2seq_forward.1']
  #allocation5 [shape = 'u8[512]{0}', space=smem, size = 0x200, scoped, tag = 'prefetched SMEM operand 0']
  %s0 = inlined_call_operand.vmem [shape: s32[7], index: 0, kind: input, shape index: {}]
  %s1 = inlined_call_operand.vmem [shape: f32[7,2,128], index: 1, kind: input, shape index: {}]
  %s2 = inlined_call_operand.vmem [shape: f32[2,128], index: 2, kind: input, shape index: {}]
  %s3 = inlined_call_operand.hbm [shape: f32[128,128], index: 3, kind: input, shape index: {}]
  %s4 = inlined_call_operand.hbm [shape: f32[128,384], index: 4, kind: input, shape index: {}]
  %s5 = inlined_call_operand.hbm [shape: f32[128,384], index: 5, kind: input, shape index: {}]
  %s6 = inlined_call_operand.hbm [shape: f32[128,384], index: 6, kind: input, shape index: {}]
  %s7 = inlined_call_operand.vmem [shape: f32[1,384], index: 7, kind: input, shape index: {}]
  %s8 = inlined_call_operand.vmem [shape: f32[1,384], index: 8, kind: input, shape index: {}]
  %s9 = inlined_call_operand.hbm [shape: f32[128,128], index: 9, kind: input, shape index: {}]
  %s10 = inlined_call_operand.hbm [shape: f32[128,128], index: 10, kind: input, shape index: {}]
  %s11 = inlined_call_operand.hbm [shape: f32[128,128], index: 11, kind: input, shape index: {}]
  %s12 = inlined_call_operand.vmem [shape: f32[1,128], index: 12, kind: input, shape index: {}]
  %s13 = inlined_call_operand.vmem [shape: f32[7,2,128], index: 13, kind: output, shape index: {}]
  %s14 = sld [smem:[#allocation0]]
  $region113: #{seq2seq_forward.1} parent=0
    _
  %s16 = ssub.s32 1, %s14
  %s17 = scalar_select 0, %s16, %s14
  %s19 = sshll.u32 %s0, 4
  %s20 = int_to_ptr.vmem [resolvable:$true] %s19
  %22 = dma.vmem_to_smem %s20, 16, [#allocation5], [#allocation4]
  %24 = dma.done [#allocation4], 16
  %25 = sfence
  $region1: #{seq2seq_forward.1} parent=0
    #allocation6 [shape = 'u8[65536]{0}', space=vmem, size = 0x10000, scoped, tag = 'input window, operand 3, single buffered']
    #allocation7 [shape = 's32[2]{0}', space=sflag, size = 0x8, scoped, tag = 'scoped memory for seq2seq_forward.1']
    #allocation8 [shape = 'u8[196608]{0}', space=vmem, size = 0x30000, scoped, tag = 'input window, operand 4, single buffered']
    #allocation9 [shape = 's32[1]{0}', space=sflag, size = 0x4, scoped, tag = 'scoped memory for seq2seq_forward.1']
    #allocation10 [shape = 'u8[196608]{0}', space=vmem, size = 0x30000, scoped, tag = 'input window, operand 5, single buffered']
    #allocation11 [shape = 'u8[196608]{0}', space=vmem, size = 0x30000, scoped, tag = 'input window, operand 6, single buffered']
    #allocation12 [shape = 's32[1]{0}', space=sflag, size = 0x4, scoped, tag = 'scoped memory for seq2seq_forward.1']
    #allocation13 [shape = 'u8[65536]{0}', space=vmem, size = 0x10000, scoped, tag = 'input window, operand 9, single buffered']
    #allocation14 [shape = 'u8[65536]{0}', space=vmem, size = 0x10000, scoped, tag = 'input window, operand 10, single buffered']
    #allocation15 [shape = 's32[1]{0}', space=sflag, size = 0x4, scoped, tag = 'scoped memory for seq2seq_forward.1']
    #allocation16 [shape = 'u8[65536]{0}', space=vmem, size = 0x10000, scoped, tag = 'input window, operand 11, single buffered']
    %26 = vsyncpa [#allocation7], 0
    %27 = vsyncpa [#allocation9], 0
    %28 = vsyncpa [#allocation12], 0
    %29 = vsyncpa [#allocation15], 0
    loop: start=0, step=1, limit=9
    $region2: #{seq2seq_forward.1} parent=1 // loop_pre_header
      _
    $region3: #{seq2seq_forward.1} parent=1 // loop_header
      %s31 = sphi 0, %s35
      %p32 = scmp.ge.s32.totalorder %s31, 9
      %s41 = sphi 0, %s43
      %s44 = sphi 0, %s41
      %s45 = sphi 0, %s44
      %s61 = sphi 0, %s45
      %s65 = sphi 0, %s65
      %s67 = sphi 0, %s65
      %s68 = sphi 0, %s67
      %s82 = sphi 0, %s68
      %s86 = sphi 0, %s86
      %s88 = sphi 0, %s86
      %s89 = sphi 0, %s88
      %s103 = sphi 0, %s89
      %s107 = sphi 0, %s107
      %s109 = sphi 0, %s107
      %s110 = sphi 0, %s109
      %s124 = sphi 0, %s110
      %s128 = sphi 0, %s128
      %s130 = sphi 0, %s128
      %s131 = sphi 0, %s130
      %s145 = sphi 0, %s131
      %s149 = sphi 0, %s149
      %s151 = sphi 0, %s149
      %s152 = sphi 0, %s151
      %s166 = sphi 0, %s152
      %s170 = sphi 0, %s170
      %s172 = sphi 0, %s170
      %s173 = sphi 0, %s172
      %s187 = sphi 0, %s173
      %s191 = sphi 0, %s191
      %s193 = sphi 0, %s191
      %s194 = sphi 0, %s193
      %s208 = sphi 0, %s194
      %s212 = sphi 0, %s212
      %s214 = sphi 0, %s212
      %s215 = sphi 0, %s214
      %s229 = sphi 0, %s215
      %s233 = sphi 0, %s233
      %s235 = sphi 0, %s233
      %s236 = sphi 0, %s235
      %s250 = sphi 0, %s236
      %s254 = sphi 0, %s254
      %s256 = sphi 0, %s254
      %s257 = sphi 0, %s256
      %s271 = sphi 0, %s257
      %s275 = sphi 0, %s275
      %s277 = sphi 0, %s275
      %s278 = sphi 0, %s277
      %s292 = sphi 0, %s278
      %s298 = sphi 0, %s300
      %s301 = sphi 0, %s298
      %s302 = sphi 0, %s301
      %s318 = sphi 0, %s302
    $region4: #{seq2seq_forward.1} parent=1 // loop_header_branch
      %34 = sbr.rel (%p32) target = $region8
    $region5: #{seq2seq_forward.1} parent=1 // loop_body
      %s36 = ssub.s32 %s31, 1
      %s37 = ssub.s32 %s31, 2
      %s38 = sadd.s32 %s31, 1
      %s39 = ssub.s32 %s31, %s38
      %p40 = scmp.eq.s32.totalorder %s39, 0
      %s42 = sadd.s32 %s41, 1
      %s43 = scalar_select %p40, %s41, %s42
      %p46 = pneg %p40
      %p47 = scmp.eq.s32.totalorder %s31, 6
      %p48 = por %p46, %p47
      %p49 = scmp.ne.s32.totalorder %s41, %s44
      %p50 = scmp.eq.s32.totalorder %s31, 0
      %p51 = por %p49, %p50
      %p52 = scmp.ne.s32.totalorder %s41, %s44
      %p53 = scmp.eq.s32.totalorder %s36, 6
      %p54 = por %p52, %p53
      %p55 = scmp.ne.s32.totalorder %s44, %s45
      %p56 = scmp.eq.s32.totalorder %s36, 0
      %p57 = por %p55, %p56
      %p58 = scmp.ne.s32.totalorder %s44, %s45
      %p59 = scmp.eq.s32.totalorder %s37, 6
      %p60 = por %p58, %p59
      %p62 = scmp.ne.s32.totalorder %s45, %s61
      %p63 = scmp.eq.s32.totalorder %s37, 0
      %p64 = por %p62, %p63
      %s66 = sadd.s32 %s65, 1
      %p69 = scmp.eq.s32.totalorder %s31, 6
      %p70 = scmp.ne.s32.totalorder %s65, %s67
      %p71 = scmp.eq.s32.totalorder %s31, 0
      %p72 = por %p70, %p71
      %p73 = scmp.ne.s32.totalorder %s65, %s67
      %p74 = scmp.eq.s32.totalorder %s36, 6
      %p75 = por %p73, %p74
      %p76 = scmp.ne.s32.totalorder %s67, %s68
      %p77 = scmp.eq.s32.totalorder %s36, 0
      %p78 = por %p76, %p77
      %p79 = scmp.ne.s32.totalorder %s67, %s68
      %p80 = scmp.eq.s32.totalorder %s37, 6
      %p81 = por %p79, %p80
      %p83 = scmp.ne.s32.totalorder %s68, %s82
      %p84 = scmp.eq.s32.totalorder %s37, 0
      %p85 = por %p83, %p84
      %s87 = sadd.s32 %s86, 1
      %p90 = scmp.eq.s32.totalorder %s31, 6
      %p91 = scmp.ne.s32.totalorder %s86, %s88
      %p92 = scmp.eq.s32.totalorder %s31, 0
      %p93 = por %p91, %p92
      %p94 = scmp.ne.s32.totalorder %s86, %s88
      %p95 = scmp.eq.s32.totalorder %s36, 6
      %p96 = por %p94, %p95
      %p97 = scmp.ne.s32.totalorder %s88, %s89
      %p98 = scmp.eq.s32.totalorder %s36, 0
      %p99 = por %p97, %p98
      %p100 = scmp.ne.s32.totalorder %s88, %s89
      %p101 = scmp.eq.s32.totalorder %s37, 6
      %p102 = por %p100, %p101
      %p104 = scmp.ne.s32.totalorder %s89, %s103
      %p105 = scmp.eq.s32.totalorder %s37, 0
      %p106 = por %p104, %p105
      %s108 = sadd.s32 %s107, 1
      %p111 = scmp.eq.s32.totalorder %s31, 6
      %p112 = scmp.ne.s32.totalorder %s107, %s109
      %p113 = scmp.eq.s32.totalorder %s31, 0
      %p114 = por %p112, %p113
      %p115 = scmp.ne.s32.totalorder %s107, %s109
      %p116 = scmp.eq.s32.totalorder %s36, 6
      %p117 = por %p115, %p116
      %p118 = scmp.ne.s32.totalorder %s109, %s110
      %p119 = scmp.eq.s32.totalorder %s36, 0
      %p120 = por %p118, %p119
      %p121 = scmp.ne.s32.totalorder %s109, %s110
      %p122 = scmp.eq.s32.totalorder %s37, 6
      %p123 = por %p121, %p122
      %p125 = scmp.ne.s32.totalorder %s110, %s124
      %p126 = scmp.eq.s32.totalorder %s37, 0
      %p127 = por %p125, %p126
      %s129 = sadd.s32 %s128, 1
      %p132 = scmp.eq.s32.totalorder %s31, 6
      %p133 = scmp.ne.s32.totalorder %s128, %s130
      %p134 = scmp.eq.s32.totalorder %s31, 0
      %p135 = por %p133, %p134
      %p136 = scmp.ne.s32.totalorder %s128, %s130
      %p137 = scmp.eq.s32.totalorder %s36, 6
      %p138 = por %p136, %p137
      %p139 = scmp.ne.s32.totalorder %s130, %s131
      %p140 = scmp.eq.s32.totalorder %s36, 0
      %p141 = por %p139, %p140
      %p142 = scmp.ne.s32.totalorder %s130, %s131
      %p143 = scmp.eq.s32.totalorder %s37, 6
      %p144 = por %p142, %p143
      %p146 = scmp.ne.s32.totalorder %s131, %s145
      %p147 = scmp.eq.s32.totalorder %s37, 0
      %p148 = por %p146, %p147
      %s150 = sadd.s32 %s149, 1
      %p153 = scmp.eq.s32.totalorder %s31, 6
      %p154 = scmp.ne.s32.totalorder %s149, %s151
      %p155 = scmp.eq.s32.totalorder %s31, 0
      %p156 = por %p154, %p155
      %p157 = scmp.ne.s32.totalorder %s149, %s151
      %p158 = scmp.eq.s32.totalorder %s36, 6
      %p159 = por %p157, %p158
      %p160 = scmp.ne.s32.totalorder %s151, %s152
      %p161 = scmp.eq.s32.totalorder %s36, 0
      %p162 = por %p160, %p161
      %p163 = scmp.ne.s32.totalorder %s151, %s152
      %p164 = scmp.eq.s32.totalorder %s37, 6
      %p165 = por %p163, %p164
      %p167 = scmp.ne.s32.totalorder %s152, %s166
      %p168 = scmp.eq.s32.totalorder %s37, 0
      %p169 = por %p167, %p168
      %s171 = sadd.s32 %s170, 1
      %p174 = scmp.eq.s32.totalorder %s31, 6
      %p175 = scmp.ne.s32.totalorder %s170, %s172
      %p176 = scmp.eq.s32.totalorder %s31, 0
      %p177 = por %p175, %p176
      %p178 = scmp.ne.s32.totalorder %s170, %s172
      %p179 = scmp.eq.s32.totalorder %s36, 6
      %p180 = por %p178, %p179
      %p181 = scmp.ne.s32.totalorder %s172, %s173
      %p182 = scmp.eq.s32.totalorder %s36, 0
      %p183 = por %p181, %p182
      %p184 = scmp.ne.s32.totalorder %s172, %s173
      %p185 = scmp.eq.s32.totalorder %s37, 6
      %p186 = por %p184, %p185
      %p188 = scmp.ne.s32.totalorder %s173, %s187
      %p189 = scmp.eq.s32.totalorder %s37, 0
      %p190 = por %p188, %p189
      %s192 = sadd.s32 %s191, 1
      %p195 = scmp.eq.s32.totalorder %s31, 6
      %p196 = scmp.ne.s32.totalorder %s191, %s193
      %p197 = scmp.eq.s32.totalorder %s31, 0
      %p198 = por %p196, %p197
      %p199 = scmp.ne.s32.totalorder %s191, %s193
      %p200 = scmp.eq.s32.totalorder %s36, 6
      %p201 = por %p199, %p200
      %p202 = scmp.ne.s32.totalorder %s193, %s194
      %p203 = scmp.eq.s32.totalorder %s36, 0
      %p204 = por %p202, %p203
      %p205 = scmp.ne.s32.totalorder %s193, %s194
      %p206 = scmp.eq.s32.totalorder %s37, 6
      %p207 = por %p205, %p206
      %p209 = scmp.ne.s32.totalorder %s194, %s208
      %p210 = scmp.eq.s32.totalorder %s37, 0
      %p211 = por %p209, %p210
      %s213 = sadd.s32 %s212, 1
      %p216 = scmp.eq.s32.totalorder %s31, 6
      %p217 = scmp.ne.s32.totalorder %s212, %s214
      %p218 = scmp.eq.s32.totalorder %s31, 0
      %p219 = por %p217, %p218
      %p220 = scmp.ne.s32.totalorder %s212, %s214
      %p221 = scmp.eq.s32.totalorder %s36, 6
      %p222 = por %p220, %p221
      %p223 = scmp.ne.s32.totalorder %s214, %s215
      %p224 = scmp.eq.s32.totalorder %s36, 0
      %p225 = por %p223, %p224
      %p226 = scmp.ne.s32.totalorder %s214, %s215
      %p227 = scmp.eq.s32.totalorder %s37, 6
      %p228 = por %p226, %p227
      %p230 = scmp.ne.s32.totalorder %s215, %s229
      %p231 = scmp.eq.s32.totalorder %s37, 0
      %p232 = por %p230, %p231
      %s234 = sadd.s32 %s233, 1
      %p237 = scmp.eq.s32.totalorder %s31, 6
      %p238 = scmp.ne.s32.totalorder %s233, %s235
      %p239 = scmp.eq.s32.totalorder %s31, 0
      %p240 = por %p238, %p239
      %p241 = scmp.ne.s32.totalorder %s233, %s235
      %p242 = scmp.eq.s32.totalorder %s36, 6
      %p243 = por %p241, %p242
      %p244 = scmp.ne.s32.totalorder %s235, %s236
      %p245 = scmp.eq.s32.totalorder %s36, 0
      %p246 = por %p244, %p245
      %p247 = scmp.ne.s32.totalorder %s235, %s236
      %p248 = scmp.eq.s32.totalorder %s37, 6
      %p249 = por %p247, %p248
      %p251 = scmp.ne.s32.totalorder %s236, %s250
      %p252 = scmp.eq.s32.totalorder %s37, 0
      %p253 = por %p251, %p252
      %s255 = sadd.s32 %s254, 1
      %p258 = scmp.eq.s32.totalorder %s31, 6
      %p259 = scmp.ne.s32.totalorder %s254, %s256
      %p260 = scmp.eq.s32.totalorder %s31, 0
      %p261 = por %p259, %p260
      %p262 = scmp.ne.s32.totalorder %s254, %s256
      %p263 = scmp.eq.s32.totalorder %s36, 6
      %p264 = por %p262, %p263
      %p265 = scmp.ne.s32.totalorder %s256, %s257
      %p266 = scmp.eq.s32.totalorder %s36, 0
      %p267 = por %p265, %p266
      %p268 = scmp.ne.s32.totalorder %s256, %s257
      %p269 = scmp.eq.s32.totalorder %s37, 6
      %p270 = por %p268, %p269
      %p272 = scmp.ne.s32.totalorder %s257, %s271
      %p273 = scmp.eq.s32.totalorder %s37, 0
      %p274 = por %p272, %p273
      %s276 = sadd.s32 %s275, 1
      %p279 = scmp.eq.s32.totalorder %s31, 6
      %p280 = scmp.ne.s32.totalorder %s275, %s277
      %p281 = scmp.eq.s32.totalorder %s31, 0
      %p282 = por %p280, %p281
      %p283 = scmp.ne.s32.totalorder %s275, %s277
      %p284 = scmp.eq.s32.totalorder %s36, 6
      %p285 = por %p283, %p284
      %p286 = scmp.ne.s32.totalorder %s277, %s278
      %p287 = scmp.eq.s32.totalorder %s36, 0
      %p288 = por %p286, %p287
      %p289 = scmp.ne.s32.totalorder %s277, %s278
      %p290 = scmp.eq.s32.totalorder %s37, 6
      %p291 = por %p289, %p290
      %p293 = scmp.ne.s32.totalorder %s278, %s292
      %p294 = scmp.eq.s32.totalorder %s37, 0
      %p295 = por %p293, %p294
      %s296 = ssub.s32 %s31, %s38
      %p297 = scmp.eq.s32.totalorder %s296, 0
      %s299 = sadd.s32 %s298, 1
      %s300 = scalar_select %p297, %s298, %s299
      %p303 = pneg %p297
      %p304 = scmp.eq.s32.totalorder %s31, 6
      %p305 = por %p303, %p304
      %p306 = scmp.ne.s32.totalorder %s298, %s301
      %p307 = scmp.eq.s32.totalorder %s31, 0
      %p308 = por %p306, %p307
      %p309 = scmp.ne.s32.totalorder %s298, %s301
      %p310 = scmp.eq.s32.totalorder %s36, 6
      %p311 = por %p309, %p310
      %p312 = scmp.ne.s32.totalorder %s301, %s302
      %p313 = scmp.eq.s32.totalorder %s36, 0
      %p314 = por %p312, %p313
      %p315 = scmp.ne.s32.totalorder %s301, %s302
      %p316 = scmp.eq.s32.totalorder %s37, 6
      %p317 = por %p315, %p316
      %p319 = scmp.ne.s32.totalorder %s302, %s318
      %p320 = scmp.eq.s32.totalorder %s37, 0
      %p321 = por %p319, %p320
      %p322 = scmp.le.s32.totalorder 1, %s31
      %p323 = scmp.lt.s32.totalorder %s31, 8
      %p324 = pnand %p322, %p323
      %p325 = pneg %p324
      // Predicated region
      $region9: #{seq2seq_forward.1} parent=5 // pred_check
        _
      $region10: #{seq2seq_forward.1} parent=5 // pred_check_branch
        %327 = sbr.rel (%p324) target = $region12
      $region11: #{seq2seq_forward.1} parent=5 // pred_region
        %s328 = ssub.s32 %s31, 1
        // Predicated region
        $region13: #{seq2seq_forward.1} parent=11 // pred_check
          %p329 = pneg %p78
        $region14: #{seq2seq_forward.1} parent=11 // pred_check_branch
          %331 = sbr.rel (%p329) target = $region16
        $region15: #{seq2seq_forward.1} parent=11 // pred_region
          _
        $region16: #{seq2seq_forward.1} parent=11 // pred_fallthru
          _
        // Predicated region
        $region17: #{seq2seq_forward.1} parent=11 // pred_check
          %p332 = pneg %p99
        $region18: #{seq2seq_forward.1} parent=11 // pred_check_branch
          %334 = sbr.rel (%p332) target = $region20
        $region19: #{seq2seq_forward.1} parent=11 // pred_region
          %336 = vsyncadd [#allocation7], 0
          %s337 = sshll.u32 %s3, 4
          %s338 = int_to_ptr.hbm [resolvable:$true] %s337
          %s339 = sshll.u32 [#allocation6], 4
          %s340 = int_to_ptr.vmem [resolvable:$true] %s339
          %345 = dma.hbm_to_vmem [thread:$0]  %s338, 2048, %s340, [#allocation7], 128, 128, 8
        $region20: #{seq2seq_forward.1} parent=11 // pred_fallthru
          _
        // Predicated region
        $region21: #{seq2seq_forward.1} parent=11 // pred_check
          %p346 = pneg %p120
        $region22: #{seq2seq_forward.1} parent=11 // pred_check_branch
          %348 = sbr.rel (%p346) target = $region24
        $region23: #{seq2seq_forward.1} parent=11 // pred_region
          %350 = vsyncadd [#allocation9], 0
          %s351 = sshll.u32 %s4, 4
          %s352 = int_to_ptr.hbm [resolvable:$true] %s351
          %s353 = sshll.u32 [#allocation8], 4
          %s354 = int_to_ptr.vmem [resolvable:$true] %s353
          %359 = dma.hbm_to_vmem [thread:$0]  %s352, 6144, %s354, [#allocation9], 384, 384, 24
        $region24: #{seq2seq_forward.1} parent=11 // pred_fallthru
          _
        // Predicated region
        $region25: #{seq2seq_forward.1} parent=11 // pred_check
          %p360 = pneg %p141
        $region26: #{seq2seq_forward.1} parent=11 // pred_check_branch
          %362 = sbr.rel (%p360) target = $region28
        $region27: #{seq2seq_forward.1} parent=11 // pred_region
          %364 = vsyncadd [#allocation9], 0
          %s365 = sshll.u32 %s5, 4
          %s366 = int_to_ptr.hbm [resolvable:$true] %s365
          %s367 = sshll.u32 [#allocation10], 4
          %s368 = int_to_ptr.vmem [resolvable:$true] %s367
          %373 = dma.hbm_to_vmem [thread:$0]  %s366, 6144, %s368, [#allocation9], 384, 384, 24
        $region28: #{seq2seq_forward.1} parent=11 // pred_fallthru
          _
        // Predicated region
        $region29: #{seq2seq_forward.1} parent=11 // pred_check
          %p374 = pneg %p162
        $region30: #{seq2seq_forward.1} parent=11 // pred_check_branch
          %376 = sbr.rel (%p374) target = $region32
        $region31: #{seq2seq_forward.1} parent=11 // pred_region
          %378 = vsyncadd [#allocation12], 0
          %s379 = sshll.u32 %s6, 4
          %s380 = int_to_ptr.hbm [resolvable:$true] %s379
          %s381 = sshll.u32 [#allocation11], 4
          %s382 = int_to_ptr.vmem [resolvable:$true] %s381
          %387 = dma.hbm_to_vmem [thread:$0]  %s380, 6144, %s382, [#allocation12], 384, 384, 24
        $region32: #{seq2seq_forward.1} parent=11 // pred_fallthru
          _
        // Predicated region
        $region33: #{seq2seq_forward.1} parent=11 // pred_check
          %p388 = pneg %p183
        $region34: #{seq2seq_forward.1} parent=11 // pred_check_branch
          %390 = sbr.rel (%p388) target = $region36
        $region35: #{seq2seq_forward.1} parent=11 // pred_region
          _
        $region36: #{seq2seq_forward.1} parent=11 // pred_fallthru
          _
        // Predicated region
        $region37: #{seq2seq_forward.1} parent=11 // pred_check
          %p391 = pneg %p204
        $region38: #{seq2seq_forward.1} parent=11 // pred_check_branch
          %393 = sbr.rel (%p391) target = $region40
        $region39: #{seq2seq_forward.1} parent=11 // pred_region
          _
        $region40: #{seq2seq_forward.1} parent=11 // pred_fallthru
          _
        // Predicated region
        $region41: #{seq2seq_forward.1} parent=11 // pred_check
          %p394 = pneg %p225
        $region42: #{seq2seq_forward.1} parent=11 // pred_check_branch
          %396 = sbr.rel (%p394) target = $region44
        $region43: #{seq2seq_forward.1} parent=11 // pred_region
          %398 = vsyncadd [#allocation12], 0
          %s399 = sshll.u32 %s9, 4
          %s400 = int_to_ptr.hbm [resolvable:$true] %s399
          %s401 = sshll.u32 [#allocation13], 4
          %s402 = int_to_ptr.vmem [resolvable:$true] %s401
          %407 = dma.hbm_to_vmem [thread:$0]  %s400, 2048, %s402, [#allocation12], 128, 128, 8
        $region44: #{seq2seq_forward.1} parent=11 // pred_fallthru
          _
        // Predicated region
        $region45: #{seq2seq_forward.1} parent=11 // pred_check
          %p408 = pneg %p246
        $region46: #{seq2seq_forward.1} parent=11 // pred_check_branch
          %410 = sbr.rel (%p408) target = $region48
        $region47: #{seq2seq_forward.1} parent=11 // pred_region
          %412 = vsyncadd [#allocation15], 0
          %s413 = sshll.u32 %s10, 4
          %s414 = int_to_ptr.hbm [resolvable:$true] %s413
          %s415 = sshll.u32 [#allocation14], 4
          %s416 = int_to_ptr.vmem [resolvable:$true] %s415
          %421 = dma.hbm_to_vmem [thread:$0]  %s414, 2048, %s416, [#allocation15], 128, 128, 8
        $region48: #{seq2seq_forward.1} parent=11 // pred_fallthru
          _
        // Predicated region
        $region49: #{seq2seq_forward.1} parent=11 // pred_check
          %p422 = pneg %p267
        $region50: #{seq2seq_forward.1} parent=11 // pred_check_branch
          %424 = sbr.rel (%p422) target = $region52
        $region51: #{seq2seq_forward.1} parent=11 // pred_region
          %426 = vsyncadd [#allocation15], 0
          %s427 = sshll.u32 %s11, 4
          %s428 = int_to_ptr.hbm [resolvable:$true] %s427
          %s429 = sshll.u32 [#allocation16], 4
          %s430 = int_to_ptr.vmem [resolvable:$true] %s429
          %435 = dma.hbm_to_vmem [thread:$0]  %s428, 2048, %s430, [#allocation15], 128, 128, 8
        $region52: #{seq2seq_forward.1} parent=11 // pred_fallthru
          _
        // Predicated region
        $region53: #{seq2seq_forward.1} parent=11 // pred_check
          %p436 = pneg %p288
        $region54: #{seq2seq_forward.1} parent=11 // pred_check_branch
          %438 = sbr.rel (%p436) target = $region56
        $region55: #{seq2seq_forward.1} parent=11 // pred_region
          _
        $region56: #{seq2seq_forward.1} parent=11 // pred_fallthru
          _
      $region12: #{seq2seq_forward.1} parent=5 // pred_fallthru
        _
      %p439 = scmp.lt.s32.totalorder %s31, 7
      // Predicated region
      $region57: #{seq2seq_forward.1} parent=5 // pred_check
        %p440 = pneg %p439
      $region58: #{seq2seq_forward.1} parent=5 // pred_check_branch
        %442 = sbr.rel (%p440) target = $region60
      $region59: #{seq2seq_forward.1} parent=5 // pred_region
        // Predicated region
        $region61: #{seq2seq_forward.1} parent=59 // pred_check
          %p443 = pneg %p51
        $region62: #{seq2seq_forward.1} parent=59 // pred_check_branch
          %445 = sbr.rel (%p443) target = $region64
        $region63: #{seq2seq_forward.1} parent=59 // pred_region
          %p446 = scmp.lt.s32.totalorder %s31, 6
          %s447 = scalar_select %p446, %s31, 6
          %s448 = smul.addr %s447, 2
          %s449 = scalar_lea.vmem %s1, %s448
        $region64: #{seq2seq_forward.1} parent=59 // pred_fallthru
          _
      $region60: #{seq2seq_forward.1} parent=5 // pred_fallthru
        _
      %p450 = scmp.le.s32.totalorder 1, %s31
      %p451 = scmp.lt.s32.totalorder %s31, 8
      %p452 = pnand %p450, %p451
      %p453 = pneg %p452
      // Predicated region
      $region65: #{seq2seq_forward.1} parent=5 // pred_check
        _
      $region66: #{seq2seq_forward.1} parent=5 // pred_check_branch
        %455 = sbr.rel (%p452) target = $region68
      $region67: #{seq2seq_forward.1} parent=5 // pred_region
        %s456 = ssub.s32 %s31, 1
        // Predicated region
        $region69: #{seq2seq_forward.1} parent=67 // pred_check
          %p457 = pneg %p99
        $region70: #{seq2seq_forward.1} parent=67 // pred_check_branch
          %459 = sbr.rel (%p457) target = $region72
        $region71: #{seq2seq_forward.1} parent=67 // pred_region
          %461 = dma.done [#allocation7], 2048
        $region72: #{seq2seq_forward.1} parent=67 // pred_fallthru
          _
        // Predicated region
        $region73: #{seq2seq_forward.1} parent=67 // pred_check
          %p462 = pneg %p120
        $region74: #{seq2seq_forward.1} parent=67 // pred_check_branch
          %464 = sbr.rel (%p462) target = $region76
        $region75: #{seq2seq_forward.1} parent=67 // pred_region
          %466 = dma.done [#allocation9], 6144
        $region76: #{seq2seq_forward.1} parent=67 // pred_fallthru
          _
        // Predicated region
        $region77: #{seq2seq_forward.1} parent=67 // pred_check
          %p467 = pneg %p141
        $region78: #{seq2seq_forward.1} parent=67 // pred_check_branch
          %469 = sbr.rel (%p467) target = $region80
        $region79: #{seq2seq_forward.1} parent=67 // pred_region
          %471 = dma.done [#allocation9], 6144
        $region80: #{seq2seq_forward.1} parent=67 // pred_fallthru
          _
        // Predicated region
        $region81: #{seq2seq_forward.1} parent=67 // pred_check
          %p472 = pneg %p162
        $region82: #{seq2seq_forward.1} parent=67 // pred_check_branch
          %474 = sbr.rel (%p472) target = $region84
        $region83: #{seq2seq_forward.1} parent=67 // pred_region
          %476 = dma.done [#allocation12], 6144
        $region84: #{seq2seq_forward.1} parent=67 // pred_fallthru
          _
        // Predicated region
        $region85: #{seq2seq_forward.1} parent=67 // pred_check
          %p477 = pneg %p225
        $region86: #{seq2seq_forward.1} parent=67 // pred_check_branch
          %479 = sbr.rel (%p477) target = $region88
        $region87: #{seq2seq_forward.1} parent=67 // pred_region
          %481 = dma.done [#allocation12], 2048
        $region88: #{seq2seq_forward.1} parent=67 // pred_fallthru
          _
        // Predicated region
        $region89: #{seq2seq_forward.1} parent=67 // pred_check
          %p482 = pneg %p246
        $region90: #{seq2seq_forward.1} parent=67 // pred_check_branch
          %484 = sbr.rel (%p482) target = $region92
        $region91: #{seq2seq_forward.1} parent=67 // pred_region
          %486 = dma.done [#allocation15], 2048
        $region92: #{seq2seq_forward.1} parent=67 // pred_fallthru
          _
        // Predicated region
        $region93: #{seq2seq_forward.1} parent=67 // pred_check
          %p487 = pneg %p267
        $region94: #{seq2seq_forward.1} parent=67 // pred_check_branch
          %489 = sbr.rel (%p487) target = $region96
        $region95: #{seq2seq_forward.1} parent=67 // pred_region
          %491 = dma.done [#allocation15], 2048
        $region96: #{seq2seq_forward.1} parent=67 // pred_fallthru
          _
        %p492 = scmp.lt.s32.totalorder %s36, 6
        %s493 = scalar_select %p492, %s36, 6
        %s494 = smul.addr %s493, 2
        %s495 = scalar_lea.vmem %s1, %s494
        %p496 = pneg %p57
        %p497 = pneg %p54
        %p498 = pneg %p78
        %p499 = pneg %p75
        %p500 = pneg %p99
        %p501 = pneg %p96
        %p502 = pneg %p120
        %p503 = pneg %p117
        %p504 = pneg %p141
        %p505 = pneg %p138
        %p506 = pneg %p162
        %p507 = pneg %p159
        %p508 = pneg %p183
        %p509 = pneg %p180
        %p510 = pneg %p204
        %p511 = pneg %p201
        %p512 = pneg %p225
        %p513 = pneg %p222
        %p514 = pneg %p246
        %p515 = pneg %p243
        %p516 = pneg %p267
        %p517 = pneg %p264
        %p518 = pneg %p288
        %p519 = pneg %p285
        %p520 = pneg %p314
        %p521 = pneg %p311
        %p522 = scmp.lt.s32.totalorder %s36, 6
        %s523 = scalar_select %p522, %s36, 6
        %s524 = smul.addr %s523, 2
        %s525 = scalar_lea.vmem %s13, %s524
        %p526 = scmp.lt.s32.totalorder %s36, 6
        %s527 = scalar_select %p526, %s36, 6
        %s528 = smul.addr %s527, 2
        %s529 = scalar_lea.vmem %s1, %s528
        %p530 = scmp.lt.s32.totalorder %s36, 6
        %s531 = scalar_select %p530, %s36, 6
        %s532 = smul.addr %s531, 2
        %s533 = scalar_lea.vmem %s13, %s532
        %p534 = scmp.eq.s32.totalorder %s36, 0
        // Predicated region
        $region97: #{seq2seq_forward.1} parent=67 // pred_check
          %p535 = pneg %p534
        $region98: #{seq2seq_forward.1} parent=67 // pred_check_branch
          %537 = sbr.rel (%p535) target = $region100
        $region99: #{seq2seq_forward.1} parent=67 // pred_region
          %v538 = vld [vmem:[%s2] sm:$0x3]
          %539 = vst [vmem:[#allocation2] sm:$0x3] %v538
          %540 = vst [vmem:[#allocation3] sm:$0x3] 0.0
        $region100: #{seq2seq_forward.1} parent=67 // pred_fallthru
          _
        %v541 = vld [vmem:[%s2] sm:$0x3]
        %v542 = vld [vmem:[#allocation2] sm:$0x3]
        %s543 = sld [smem:[#allocation5 + %s36]]
        %p544 = scmp.eq.s32.totalorder %s543, 1
        %p545 = por %p534, %p544
        %s546 = scalar_select %p545, 1, 0
        %s547 = scvt.s32.f32 %s546
        %v548 = vld [vmem:[%s529] sm:$0x3]
        %v549 = vstv %s547
        %v550 = vmul.f32 %v549, %v548
        %s551 = ssub.f32 1.0, %s547
        %v552 = vld [vmem:[#allocation3] sm:$0x3]
        %v553 = vstv %s551
        %v554 = vmul.f32 %v553, %v552
        %v555 = vadd.f32 %v550, %v554
        %v556 = vld [vmem:[#allocation6] sm:$0xff]
        %v557 = vld [vmem:[#allocation6 + $0x8] sm:$0xff]
        %v558 = vld [vmem:[#allocation6 + $0x10] sm:$0xff]
        %v559 = vld [vmem:[#allocation6 + $0x18] sm:$0xff]
        %v560 = vld [vmem:[#allocation6 + $0x20] sm:$0xff]
        %v561 = vld [vmem:[#allocation6 + $0x28] sm:$0xff]
        %v562 = vld [vmem:[#allocation6 + $0x30] sm:$0xff]
        %v563 = vld [vmem:[#allocation6 + $0x38] sm:$0xff]
        %v564 = vld [vmem:[#allocation6 + $0x40] sm:$0xff]
        %v565 = vld [vmem:[#allocation6 + $0x48] sm:$0xff]
        %v566 = vld [vmem:[#allocation6 + $0x50] sm:$0xff]
        %v567 = vld [vmem:[#allocation6 + $0x58] sm:$0xff]
        %v568 = vld [vmem:[#allocation6 + $0x60] sm:$0xff]
        %v569 = vld [vmem:[#allocation6 + $0x68] sm:$0xff]
        %v570 = vld [vmem:[#allocation6 + $0x70] sm:$0xff]
        %v571 = vld [vmem:[#allocation6 + $0x78] sm:$0xff]
        %572 = vmatpush.msra.mxu0 %v571
        %573 = vmatpush.msra.mxu0 %v570
        %574 = vmatpush.msra.mxu0 %v569
        %575 = vmatpush.msra.mxu0 %v568
        %576 = vmatpush.msra.mxu0 %v567
        %577 = vmatpush.msra.mxu0 %v566
        %578 = vmatpush.msra.mxu0 %v565
        %579 = vmatpush.msra.mxu0 %v564
        %580 = vmatpush.msra.mxu0 %v563
        %581 = vmatpush.msra.mxu0 %v562
        %582 = vmatpush.msra.mxu0 %v561
        %583 = vmatpush.msra.mxu0 %v560
        %584 = vmatpush.msra.mxu0 %v559
        %585 = vmatpush.msra.mxu0 %v558
        %586 = vmatpush.msra.mxu0 %v557
        %587 = vmatpush.msra.mxu0 %v556
        %588 = vmatmul.f32.gmra.mxu0 %v555
        %v589 = vpop.f32.mrf.mxu0
        %v590 = vadd.f32 0.0, %v589
        %591 = vdwg.mxu0
        %v592 = vld [vmem:[#allocation8] sm:$0xff]
        %v593 = vld [vmem:[#allocation8 + $0x8] sm:$0xff]
        %v594 = vld [vmem:[#allocation8 + $0x10] sm:$0xff]
        %v595 = vld [vmem:[#allocation8 + $0x18] sm:$0xff]
        %v596 = vld [vmem:[#allocation8 + $0x20] sm:$0xff]
        %v597 = vld [vmem:[#allocation8 + $0x28] sm:$0xff]
        %v598 = vld [vmem:[#allocation8 + $0x30] sm:$0xff]
        %v599 = vld [vmem:[#allocation8 + $0x38] sm:$0xff]
        %v600 = vld [vmem:[#allocation8 + $0x40] sm:$0xff]
        %v601 = vld [vmem:[#allocation8 + $0x48] sm:$0xff]
        %v602 = vld [vmem:[#allocation8 + $0x50] sm:$0xff]
        %v603 = vld [vmem:[#allocation8 + $0x58] sm:$0xff]
        %v604 = vld [vmem:[#allocation8 + $0x60] sm:$0xff]
        %v605 = vld [vmem:[#allocation8 + $0x68] sm:$0xff]
        %v606 = vld [vmem:[#allocation8 + $0x70] sm:$0xff]
        %v607 = vld [vmem:[#allocation8 + $0x78] sm:$0xff]
        %v608 = vld [vmem:[#allocation8 + $0x80] sm:$0xff]
        %v609 = vld [vmem:[#allocation8 + $0x88] sm:$0xff]
        %v610 = vld [vmem:[#allocation8 + $0x90] sm:$0xff]
        %v611 = vld [vmem:[#allocation8 + $0x98] sm:$0xff]
        %v612 = vld [vmem:[#allocation8 + $0xa0] sm:$0xff]
        %v613 = vld [vmem:[#allocation8 + $0xa8] sm:$0xff]
        %v614 = vld [vmem:[#allocation8 + $0xb0] sm:$0xff]
        %v615 = vld [vmem:[#allocation8 + $0xb8] sm:$0xff]
        %v616 = vld [vmem:[#allocation8 + $0xc0] sm:$0xff]
        %v617 = vld [vmem:[#allocation8 + $0xc8] sm:$0xff]
        %v618 = vld [vmem:[#allocation8 + $0xd0] sm:$0xff]
        %v619 = vld [vmem:[#allocation8 + $0xd8] sm:$0xff]
        %v620 = vld [vmem:[#allocation8 + $0xe0] sm:$0xff]
        %v621 = vld [vmem:[#allocation8 + $0xe8] sm:$0xff]
        %v622 = vld [vmem:[#allocation8 + $0xf0] sm:$0xff]
        %v623 = vld [vmem:[#allocation8 + $0xf8] sm:$0xff]
        %v624 = vld [vmem:[#allocation8 + $0x100] sm:$0xff]
        %v625 = vld [vmem:[#allocation8 + $0x108] sm:$0xff]
        %v626 = vld [vmem:[#allocation8 + $0x110] sm:$0xff]
        %v627 = vld [vmem:[#allocation8 + $0x118] sm:$0xff]
        %v628 = vld [vmem:[#allocation8 + $0x120] sm:$0xff]
        %v629 = vld [vmem:[#allocation8 + $0x128] sm:$0xff]
        %v630 = vld [vmem:[#allocation8 + $0x130] sm:$0xff]
        %v631 = vld [vmem:[#allocation8 + $0x138] sm:$0xff]
        %v632 = vld [vmem:[#allocation8 + $0x140] sm:$0xff]
        %v633 = vld [vmem:[#allocation8 + $0x148] sm:$0xff]
        %v634 = vld [vmem:[#allocation8 + $0x150] sm:$0xff]
        %v635 = vld [vmem:[#allocation8 + $0x158] sm:$0xff]
        %v636 = vld [vmem:[#allocation8 + $0x160] sm:$0xff]
        %v637 = vld [vmem:[#allocation8 + $0x168] sm:$0xff]
        %v638 = vld [vmem:[#allocation8 + $0x170] sm:$0xff]
        %v639 = vld [vmem:[#allocation8 + $0x178] sm:$0xff]
        %v640 = vld [vmem:[#allocation10] sm:$0xff]
        %v641 = vld [vmem:[#allocation10 + $0x8] sm:$0xff]
        %v642 = vld [vmem:[#allocation10 + $0x10] sm:$0xff]
        %v643 = vld [vmem:[#allocation10 + $0x18] sm:$0xff]
        %v644 = vld [vmem:[#allocation10 + $0x20] sm:$0xff]
        %v645 = vld [vmem:[#allocation10 + $0x28] sm:$0xff]
        %v646 = vld [vmem:[#allocation10 + $0x30] sm:$0xff]
        %v647 = vld [vmem:[#allocation10 + $0x38] sm:$0xff]
        %v648 = vld [vmem:[#allocation10 + $0x40] sm:$0xff]
        %v649 = vld [vmem:[#allocation10 + $0x48] sm:$0xff]
        %v650 = vld [vmem:[#allocation10 + $0x50] sm:$0xff]
        %v651 = vld [vmem:[#allocation10 + $0x58] sm:$0xff]
        %v652 = vld [vmem:[#allocation10 + $0x60] sm:$0xff]
        %v653 = vld [vmem:[#allocation10 + $0x68] sm:$0xff]
        %v654 = vld [vmem:[#allocation10 + $0x70] sm:$0xff]
        %v655 = vld [vmem:[#allocation10 + $0x78] sm:$0xff]
        %v656 = vld [vmem:[#allocation10 + $0x80] sm:$0xff]
        %v657 = vld [vmem:[#allocation10 + $0x88] sm:$0xff]
        %v658 = vld [vmem:[#allocation10 + $0x90] sm:$0xff]
        %v659 = vld [vmem:[#allocation10 + $0x98] sm:$0xff]
        %v660 = vld [vmem:[#allocation10 + $0xa0] sm:$0xff]
        %v661 = vld [vmem:[#allocation10 + $0xa8] sm:$0xff]
        %v662 = vld [vmem:[#allocation10 + $0xb0] sm:$0xff]
        %v663 = vld [vmem:[#allocation10 + $0xb8] sm:$0xff]
        %v664 = vld [vmem:[#allocation10 + $0xc0] sm:$0xff]
        %v665 = vld [vmem:[#allocation10 + $0xc8] sm:$0xff]
        %v666 = vld [vmem:[#allocation10 + $0xd0] sm:$0xff]
        %v667 = vld [vmem:[#allocation10 + $0xd8] sm:$0xff]
        %v668 = vld [vmem:[#allocation10 + $0xe0] sm:$0xff]
        %v669 = vld [vmem:[#allocation10 + $0xe8] sm:$0xff]
        %v670 = vld [vmem:[#allocation10 + $0xf0] sm:$0xff]
        %v671 = vld [vmem:[#allocation10 + $0xf8] sm:$0xff]
        %v672 = vld [vmem:[#allocation10 + $0x100] sm:$0xff]
        %v673 = vld [vmem:[#allocation10 + $0x108] sm:$0xff]
        %v674 = vld [vmem:[#allocation10 + $0x110] sm:$0xff]
        %v675 = vld [vmem:[#allocation10 + $0x118] sm:$0xff]
        %v676 = vld [vmem:[#allocation10 + $0x120] sm:$0xff]
        %v677 = vld [vmem:[#allocation10 + $0x128] sm:$0xff]
        %v678 = vld [vmem:[#allocation10 + $0x130] sm:$0xff]
        %v679 = vld [vmem:[#allocation10 + $0x138] sm:$0xff]
        %v680 = vld [vmem:[#allocation10 + $0x140] sm:$0xff]
        %v681 = vld [vmem:[#allocation10 + $0x148] sm:$0xff]
        %v682 = vld [vmem:[#allocation10 + $0x150] sm:$0xff]
        %v683 = vld [vmem:[#allocation10 + $0x158] sm:$0xff]
        %v684 = vld [vmem:[#allocation10 + $0x160] sm:$0xff]
        %v685 = vld [vmem:[#allocation10 + $0x168] sm:$0xff]
        %v686 = vld [vmem:[#allocation10 + $0x170] sm:$0xff]
        %v687 = vld [vmem:[#allocation10 + $0x178] sm:$0xff]
        %688 = vmatpush.msra.mxu0 %v685
        %689 = vmatpush.msra.mxu0 %v682
        %690 = vmatpush.msra.mxu0 %v679
        %691 = vmatpush.msra.mxu0 %v676
        %692 = vmatpush.msra.mxu0 %v673
        %693 = vmatpush.msra.mxu0 %v670
        %694 = vmatpush.msra.mxu0 %v667
        %695 = vmatpush.msra.mxu0 %v664
        %696 = vmatpush.msra.mxu0 %v661
        %697 = vmatpush.msra.mxu0 %v658
        %698 = vmatpush.msra.mxu0 %v655
        %699 = vmatpush.msra.mxu0 %v652
        %700 = vmatpush.msra.mxu0 %v649
        %701 = vmatpush.msra.mxu0 %v646
        %702 = vmatpush.msra.mxu0 %v643
        %703 = vmatpush.msra.mxu0 %v640
        %704 = vmatmul.f32.gmra.mxu0 %v541
        %v705 = vpop.f32.mrf.mxu0
        %v706 = vadd.f32 0.0, %v705
        %707 = vdwg.mxu0
        %708 = vmatpush.msra.mxu0 %v686
        %709 = vmatpush.msra.mxu0 %v683
        %710 = vmatpush.msra.mxu0 %v680
        %711 = vmatpush.msra.mxu0 %v677
        %712 = vmatpush.msra.mxu0 %v674
        %713 = vmatpush.msra.mxu0 %v671
        %714 = vmatpush.msra.mxu0 %v668
        %715 = vmatpush.msra.mxu0 %v665
        %716 = vmatpush.msra.mxu0 %v662
        %717 = vmatpush.msra.mxu0 %v659
        %718 = vmatpush.msra.mxu0 %v656
        %719 = vmatpush.msra.mxu0 %v653
        %720 = vmatpush.msra.mxu0 %v650
        %721 = vmatpush.msra.mxu0 %v647
        %722 = vmatpush.msra.mxu0 %v644
        %723 = vmatpush.msra.mxu0 %v641
        %724 = vmatmul.f32.gmra.mxu0 %v541
        %v725 = vpop.f32.mrf.mxu0
        %v726 = vadd.f32 0.0, %v725
        %727 = vdwg.mxu0
        %728 = vmatpush.msra.mxu0 %v687
        %729 = vmatpush.msra.mxu0 %v684
        %730 = vmatpush.msra.mxu0 %v681
        %731 = vmatpush.msra.mxu0 %v678
        %732 = vmatpush.msra.mxu0 %v675
        %733 = vmatpush.msra.mxu0 %v672
        %734 = vmatpush.msra.mxu0 %v669
        %735 = vmatpush.msra.mxu0 %v666
        %736 = vmatpush.msra.mxu0 %v663
        %737 = vmatpush.msra.mxu0 %v660
        %738 = vmatpush.msra.mxu0 %v657
        %739 = vmatpush.msra.mxu0 %v654
        %740 = vmatpush.msra.mxu0 %v651
        %741 = vmatpush.msra.mxu0 %v648
        %742 = vmatpush.msra.mxu0 %v645
        %743 = vmatpush.msra.mxu0 %v642
        %744 = vmatmul.f32.gmra.mxu0 %v541
        %v745 = vpop.f32.mrf.mxu0
        %v746 = vadd.f32 0.0, %v745
        %747 = vdwg.mxu0
        %748 = vmatpush.msra.mxu0 %v637
        %749 = vmatpush.msra.mxu0 %v634
        %750 = vmatpush.msra.mxu0 %v631
        %751 = vmatpush.msra.mxu0 %v628
        %752 = vmatpush.msra.mxu0 %v625
        %753 = vmatpush.msra.mxu0 %v622
        %754 = vmatpush.msra.mxu0 %v619
        %755 = vmatpush.msra.mxu0 %v616
        %756 = vmatpush.msra.mxu0 %v613
        %757 = vmatpush.msra.mxu0 %v610
        %758 = vmatpush.msra.mxu0 %v607
        %759 = vmatpush.msra.mxu0 %v604
        %760 = vmatpush.msra.mxu0 %v601
        %761 = vmatpush.msra.mxu0 %v598
        %762 = vmatpush.msra.mxu0 %v595
        %763 = vmatpush.msra.mxu0 %v592
        %764 = vmatmul.f32.gmra.mxu0 %v590
        %v765 = vpop.f32.mrf.mxu0
        %v766 = vadd.f32 %v706, %v765
        %767 = vdwg.mxu0
        %768 = vmatpush.msra.mxu0 %v638
        %769 = vmatpush.msra.mxu0 %v635
        %770 = vmatpush.msra.mxu0 %v632
        %771 = vmatpush.msra.mxu0 %v629
        %772 = vmatpush.msra.mxu0 %v626
        %773 = vmatpush.msra.mxu0 %v623
        %774 = vmatpush.msra.mxu0 %v620
        %775 = vmatpush.msra.mxu0 %v617
        %776 = vmatpush.msra.mxu0 %v614
        %777 = vmatpush.msra.mxu0 %v611
        %778 = vmatpush.msra.mxu0 %v608
        %779 = vmatpush.msra.mxu0 %v605
        %780 = vmatpush.msra.mxu0 %v602
        %781 = vmatpush.msra.mxu0 %v599
        %782 = vmatpush.msra.mxu0 %v596
        %783 = vmatpush.msra.mxu0 %v593
        %784 = vmatmul.f32.gmra.mxu0 %v590
        %v785 = vpop.f32.mrf.mxu0
        %v786 = vadd.f32 %v726, %v785
        %787 = vdwg.mxu0
        %788 = vmatpush.msra.mxu0 %v639
        %789 = vmatpush.msra.mxu0 %v636
        %790 = vmatpush.msra.mxu0 %v633
        %791 = vmatpush.msra.mxu0 %v630
        %792 = vmatpush.msra.mxu0 %v627
        %793 = vmatpush.msra.mxu0 %v624
        %794 = vmatpush.msra.mxu0 %v621
        %795 = vmatpush.msra.mxu0 %v618
        %796 = vmatpush.msra.mxu0 %v615
        %797 = vmatpush.msra.mxu0 %v612
        %798 = vmatpush.msra.mxu0 %v609
        %799 = vmatpush.msra.mxu0 %v606
        %800 = vmatpush.msra.mxu0 %v603
        %801 = vmatpush.msra.mxu0 %v600
        %802 = vmatpush.msra.mxu0 %v597
        %803 = vmatpush.msra.mxu0 %v594
        %804 = vmatmul.f32.gmra.mxu0 %v590
        %v805 = vpop.f32.mrf.mxu0
        %v806 = vadd.f32 %v746, %v805
        %807 = vdwg.mxu0
        %v808 = vld [vmem:[%s7] sm:$0x7]
        %v810 = vperm.slane %v808, 0
        %v811 = vperm.slane %v808, 1
        %v812 = vperm.slane %v808, 2
        %v816 = vadd.f32 %v766, %v810
        %v817 = vadd.f32 %v786, %v811
        %v818 = vadd.f32 %v806, %v812
        %v819 = vld [vmem:[#allocation11] sm:$0xff]
        %v820 = vld [vmem:[#allocation11 + $0x8] sm:$0xff]
        %v821 = vld [vmem:[#allocation11 + $0x10] sm:$0xff]
        %v822 = vld [vmem:[#allocation11 + $0x18] sm:$0xff]
        %v823 = vld [vmem:[#allocation11 + $0x20] sm:$0xff]
        %v824 = vld [vmem:[#allocation11 + $0x28] sm:$0xff]
        %v825 = vld [vmem:[#allocation11 + $0x30] sm:$0xff]
        %v826 = vld [vmem:[#allocation11 + $0x38] sm:$0xff]
        %v827 = vld [vmem:[#allocation11 + $0x40] sm:$0xff]
        %v828 = vld [vmem:[#allocation11 + $0x48] sm:$0xff]
        %v829 = vld [vmem:[#allocation11 + $0x50] sm:$0xff]
        %v830 = vld [vmem:[#allocation11 + $0x58] sm:$0xff]
        %v831 = vld [vmem:[#allocation11 + $0x60] sm:$0xff]
        %v832 = vld [vmem:[#allocation11 + $0x68] sm:$0xff]
        %v833 = vld [vmem:[#allocation11 + $0x70] sm:$0xff]
        %v834 = vld [vmem:[#allocation11 + $0x78] sm:$0xff]
        %v835 = vld [vmem:[#allocation11 + $0x80] sm:$0xff]
        %v836 = vld [vmem:[#allocation11 + $0x88] sm:$0xff]
        %v837 = vld [vmem:[#allocation11 + $0x90] sm:$0xff]
        %v838 = vld [vmem:[#allocation11 + $0x98] sm:$0xff]
        %v839 = vld [vmem:[#allocation11 + $0xa0] sm:$0xff]
        %v840 = vld [vmem:[#allocation11 + $0xa8] sm:$0xff]
        %v841 = vld [vmem:[#allocation11 + $0xb0] sm:$0xff]
        %v842 = vld [vmem:[#allocation11 + $0xb8] sm:$0xff]
        %v843 = vld [vmem:[#allocation11 + $0xc0] sm:$0xff]
        %v844 = vld [vmem:[#allocation11 + $0xc8] sm:$0xff]
        %v845 = vld [vmem:[#allocation11 + $0xd0] sm:$0xff]
        %v846 = vld [vmem:[#allocation11 + $0xd8] sm:$0xff]
        %v847 = vld [vmem:[#allocation11 + $0xe0] sm:$0xff]
        %v848 = vld [vmem:[#allocation11 + $0xe8] sm:$0xff]
        %v849 = vld [vmem:[#allocation11 + $0xf0] sm:$0xff]
        %v850 = vld [vmem:[#allocation11 + $0xf8] sm:$0xff]
        %v851 = vld [vmem:[#allocation11 + $0x100] sm:$0xff]
        %v852 = vld [vmem:[#allocation11 + $0x108] sm:$0xff]
        %v853 = vld [vmem:[#allocation11 + $0x110] sm:$0xff]
        %v854 = vld [vmem:[#allocation11 + $0x118] sm:$0xff]
        %v855 = vld [vmem:[#allocation11 + $0x120] sm:$0xff]
        %v856 = vld [vmem:[#allocation11 + $0x128] sm:$0xff]
        %v857 = vld [vmem:[#allocation11 + $0x130] sm:$0xff]
        %v858 = vld [vmem:[#allocation11 + $0x138] sm:$0xff]
        %v859 = vld [vmem:[#allocation11 + $0x140] sm:$0xff]
        %v860 = vld [vmem:[#allocation11 + $0x148] sm:$0xff]
        %v861 = vld [vmem:[#allocation11 + $0x150] sm:$0xff]
        %v862 = vld [vmem:[#allocation11 + $0x158] sm:$0xff]
        %v863 = vld [vmem:[#allocation11 + $0x160] sm:$0xff]
        %v864 = vld [vmem:[#allocation11 + $0x168] sm:$0xff]
        %v865 = vld [vmem:[#allocation11 + $0x170] sm:$0xff]
        %v866 = vld [vmem:[#allocation11 + $0x178] sm:$0xff]
        %v867 = vld [vmem:[%s8] sm:$0x7]
        %v869 = vperm.slane %v867, 0
        %v870 = vperm.slane %v867, 1
        %v871 = vperm.slane %v867, 2
        %875 = vmatpush.msra.mxu0 %v864
        %876 = vmatpush.msra.mxu0 %v861
        %877 = vmatpush.msra.mxu0 %v858
        %878 = vmatpush.msra.mxu0 %v855
        %879 = vmatpush.msra.mxu0 %v852
        %880 = vmatpush.msra.mxu0 %v849
        %881 = vmatpush.msra.mxu0 %v846
        %882 = vmatpush.msra.mxu0 %v843
        %883 = vmatpush.msra.mxu0 %v840
        %884 = vmatpush.msra.mxu0 %v837
        %885 = vmatpush.msra.mxu0 %v834
        %886 = vmatpush.msra.mxu0 %v831
        %887 = vmatpush.msra.mxu0 %v828
        %888 = vmatpush.msra.mxu0 %v825
        %889 = vmatpush.msra.mxu0 %v822
        %890 = vmatpush.msra.mxu0 %v819
        %891 = vmatmul.f32.gmra.mxu0 %v542
        %v892 = vpop.f32.mrf.mxu0
        %v893 = vadd.f32 %v869, %v892
        %894 = vdwg.mxu0
        %895 = vmatpush.msra.mxu0 %v865
        %896 = vmatpush.msra.mxu0 %v862
        %897 = vmatpush.msra.mxu0 %v859
        %898 = vmatpush.msra.mxu0 %v856
        %899 = vmatpush.msra.mxu0 %v853
        %900 = vmatpush.msra.mxu0 %v850
        %901 = vmatpush.msra.mxu0 %v847
        %902 = vmatpush.msra.mxu0 %v844
        %903 = vmatpush.msra.mxu0 %v841
        %904 = vmatpush.msra.mxu0 %v838
        %905 = vmatpush.msra.mxu0 %v835
        %906 = vmatpush.msra.mxu0 %v832
        %907 = vmatpush.msra.mxu0 %v829
        %908 = vmatpush.msra.mxu0 %v826
        %909 = vmatpush.msra.mxu0 %v823
        %910 = vmatpush.msra.mxu0 %v820
        %911 = vmatmul.f32.gmra.mxu0 %v542
        %v912 = vpop.f32.mrf.mxu0
        %v913 = vadd.f32 %v870, %v912
        %914 = vdwg.mxu0
        %915 = vmatpush.msra.mxu0 %v866
        %916 = vmatpush.msra.mxu0 %v863
        %917 = vmatpush.msra.mxu0 %v860
        %918 = vmatpush.msra.mxu0 %v857
        %919 = vmatpush.msra.mxu0 %v854
        %920 = vmatpush.msra.mxu0 %v851
        %921 = vmatpush.msra.mxu0 %v848
        %922 = vmatpush.msra.mxu0 %v845
        %923 = vmatpush.msra.mxu0 %v842
        %924 = vmatpush.msra.mxu0 %v839
        %925 = vmatpush.msra.mxu0 %v836
        %926 = vmatpush.msra.mxu0 %v833
        %927 = vmatpush.msra.mxu0 %v830
        %928 = vmatpush.msra.mxu0 %v827
        %929 = vmatpush.msra.mxu0 %v824
        %930 = vmatpush.msra.mxu0 %v821
        %931 = vmatmul.f32.gmra.mxu0 %v542
        %v932 = vpop.f32.mrf.mxu0
        %v933 = vadd.f32 %v871, %v932
        %934 = vdwg.mxu0
        %v935 = vadd.f32 %v816, %v893
        %v936 = vxor.u32 %v935, 2147483648
        %v937 = vmul.f32 %v936, 1.442695
        %v938 = vpow.pop %v937
        %v939 = vadd.f32 %v938, 1.0
        %v940 = vrcp.pop %v939
        %v941 = vmul.f32 %v939, %v940
        %v942 = vsub.f32 1.0, %v941
        %v943 = vmul.f32 %v940, %v942
        %v944 = vadd.f32 %v940, %v943
        %vm945 = vweird.f32 %v939
        %vm946 = vweird.f32 %v940
        %vm947 = vmor %vm945, %vm946
        %v948 = vsel %vm947, %v940, %v944
        %v949 = vand.u32 2147483647, %v939
        %vm950 = vcmp.eq.f32.partialorder %v949, 8.507059e+37
        %v951 = vand.u32 %v939, 2147483648
        %v952 = vor.u32 1.1754944e-38, %v951
        %v953 = vsel %vm950, %v952, %v948
        %v954 = vmul.f32 1.0, %v953
        %v955 = vadd.f32 %v817, %v913
        %v956 = vxor.u32 %v955, 2147483648
        %v957 = vmul.f32 %v956, 1.442695
        %v958 = vpow.pop %v957
        %v959 = vadd.f32 %v958, 1.0
        %v960 = vrcp.pop %v959
        %v961 = vmul.f32 %v959, %v960
        %v962 = vsub.f32 1.0, %v961
        %v963 = vmul.f32 %v960, %v962
        %v964 = vadd.f32 %v960, %v963
        %vm965 = vweird.f32 %v959
        %vm966 = vweird.f32 %v960
        %vm967 = vmor %vm965, %vm966
        %v968 = vsel %vm967, %v960, %v964
        %v969 = vand.u32 2147483647, %v959
        %vm970 = vcmp.eq.f32.partialorder %v969, 8.507059e+37
        %v971 = vand.u32 %v959, 2147483648
        %v972 = vor.u32 1.1754944e-38, %v971
        %v973 = vsel %vm970, %v972, %v968
        %v974 = vmul.f32 1.0, %v973
        %v975 = vmul.f32 %v954, %v933
        %v976 = vadd.f32 %v818, %v975
        %v977 = vtanh.pop %v976
        %v978 = vsub.f32 1.0, %v974
        %v979 = vmul.f32 %v978, %v977
        %v980 = vmul.f32 %v974, %v542
        %v981 = vadd.f32 %v979, %v980
        %v982 = vld [vmem:[#allocation13] sm:$0xff]
        %v983 = vld [vmem:[#allocation13 + $0x8] sm:$0xff]
        %v984 = vld [vmem:[#allocation13 + $0x10] sm:$0xff]
        %v985 = vld [vmem:[#allocation13 + $0x18] sm:$0xff]
        %v986 = vld [vmem:[#allocation13 + $0x20] sm:$0xff]
        %v987 = vld [vmem:[#allocation13 + $0x28] sm:$0xff]
        %v988 = vld [vmem:[#allocation13 + $0x30] sm:$0xff]
        %v989 = vld [vmem:[#allocation13 + $0x38] sm:$0xff]
        %v990 = vld [vmem:[#allocation13 + $0x40] sm:$0xff]
        %v991 = vld [vmem:[#allocation13 + $0x48] sm:$0xff]
        %v992 = vld [vmem:[#allocation13 + $0x50] sm:$0xff]
        %v993 = vld [vmem:[#allocation13 + $0x58] sm:$0xff]
        %v994 = vld [vmem:[#allocation13 + $0x60] sm:$0xff]
        %v995 = vld [vmem:[#allocation13 + $0x68] sm:$0xff]
        %v996 = vld [vmem:[#allocation13 + $0x70] sm:$0xff]
        %v997 = vld [vmem:[#allocation13 + $0x78] sm:$0xff]
        %v998 = vld [vmem:[#allocation14] sm:$0xff]
        %v999 = vld [vmem:[#allocation14 + $0x8] sm:$0xff]
        %v1000 = vld [vmem:[#allocation14 + $0x10] sm:$0xff]
        %v1001 = vld [vmem:[#allocation14 + $0x18] sm:$0xff]
        %v1002 = vld [vmem:[#allocation14 + $0x20] sm:$0xff]
        %v1003 = vld [vmem:[#allocation14 + $0x28] sm:$0xff]
        %v1004 = vld [vmem:[#allocation14 + $0x30] sm:$0xff]
        %v1005 = vld [vmem:[#allocation14 + $0x38] sm:$0xff]
        %v1006 = vld [vmem:[#allocation14 + $0x40] sm:$0xff]
        %v1007 = vld [vmem:[#allocation14 + $0x48] sm:$0xff]
        %v1008 = vld [vmem:[#allocation14 + $0x50] sm:$0xff]
        %v1009 = vld [vmem:[#allocation14 + $0x58] sm:$0xff]
        %v1010 = vld [vmem:[#allocation14 + $0x60] sm:$0xff]
        %v1011 = vld [vmem:[#allocation14 + $0x68] sm:$0xff]
        %v1012 = vld [vmem:[#allocation14 + $0x70] sm:$0xff]
        %v1013 = vld [vmem:[#allocation14 + $0x78] sm:$0xff]
        %1014 = vmatpush.msra.mxu0 %v1013
        %1015 = vmatpush.msra.mxu0 %v1012
        %1016 = vmatpush.msra.mxu0 %v1011
        %1017 = vmatpush.msra.mxu0 %v1010
        %1018 = vmatpush.msra.mxu0 %v1009
        %1019 = vmatpush.msra.mxu0 %v1008
        %1020 = vmatpush.msra.mxu0 %v1007
        %1021 = vmatpush.msra.mxu0 %v1006
        %1022 = vmatpush.msra.mxu0 %v1005
        %1023 = vmatpush.msra.mxu0 %v1004
        %1024 = vmatpush.msra.mxu0 %v1003
        %1025 = vmatpush.msra.mxu0 %v1002
        %1026 = vmatpush.msra.mxu0 %v1001
        %1027 = vmatpush.msra.mxu0 %v1000
        %1028 = vmatpush.msra.mxu0 %v999
        %1029 = vmatpush.msra.mxu0 %v998
        %1030 = vmatmul.f32.gmra.mxu0 %v981
        %v1031 = vpop.f32.mrf.mxu0
        %v1032 = vadd.f32 0.0, %v1031
        %1033 = vdwg.mxu0
        %1034 = vmatpush.msra.mxu0 %v997
        %1035 = vmatpush.msra.mxu0 %v996
        %1036 = vmatpush.msra.mxu0 %v995
        %1037 = vmatpush.msra.mxu0 %v994
        %1038 = vmatpush.msra.mxu0 %v993
        %1039 = vmatpush.msra.mxu0 %v992
        %1040 = vmatpush.msra.mxu0 %v991
        %1041 = vmatpush.msra.mxu0 %v990
        %1042 = vmatpush.msra.mxu0 %v989
        %1043 = vmatpush.msra.mxu0 %v988
        %1044 = vmatpush.msra.mxu0 %v987
        %1045 = vmatpush.msra.mxu0 %v986
        %1046 = vmatpush.msra.mxu0 %v985
        %1047 = vmatpush.msra.mxu0 %v984
        %1048 = vmatpush.msra.mxu0 %v983
        %1049 = vmatpush.msra.mxu0 %v982
        %1050 = vmatmul.f32.gmra.mxu0 %v590
        %v1051 = vpop.f32.mrf.mxu0
        %v1052 = vadd.f32 %v1032, %v1051
        %1053 = vdwg.mxu0
        %v1054 = vld [vmem:[#allocation16] sm:$0xff]
        %v1055 = vld [vmem:[#allocation16 + $0x8] sm:$0xff]
        %v1056 = vld [vmem:[#allocation16 + $0x10] sm:$0xff]
        %v1057 = vld [vmem:[#allocation16 + $0x18] sm:$0xff]
        %v1058 = vld [vmem:[#allocation16 + $0x20] sm:$0xff]
        %v1059 = vld [vmem:[#allocation16 + $0x28] sm:$0xff]
        %v1060 = vld [vmem:[#allocation16 + $0x30] sm:$0xff]
        %v1061 = vld [vmem:[#allocation16 + $0x38] sm:$0xff]
        %v1062 = vld [vmem:[#allocation16 + $0x40] sm:$0xff]
        %v1063 = vld [vmem:[#allocation16 + $0x48] sm:$0xff]
        %v1064 = vld [vmem:[#allocation16 + $0x50] sm:$0xff]
        %v1065 = vld [vmem:[#allocation16 + $0x58] sm:$0xff]
        %v1066 = vld [vmem:[#allocation16 + $0x60] sm:$0xff]
        %v1067 = vld [vmem:[#allocation16 + $0x68] sm:$0xff]
        %v1068 = vld [vmem:[#allocation16 + $0x70] sm:$0xff]
        %v1069 = vld [vmem:[#allocation16 + $0x78] sm:$0xff]
        %1070 = vmatpush.msra.mxu0 %v1069
        %1071 = vmatpush.msra.mxu0 %v1068
        %1072 = vmatpush.msra.mxu0 %v1067
        %1073 = vmatpush.msra.mxu0 %v1066
        %1074 = vmatpush.msra.mxu0 %v1065
        %1075 = vmatpush.msra.mxu0 %v1064
        %1076 = vmatpush.msra.mxu0 %v1063
        %1077 = vmatpush.msra.mxu0 %v1062
        %1078 = vmatpush.msra.mxu0 %v1061
        %1079 = vmatpush.msra.mxu0 %v1060
        %1080 = vmatpush.msra.mxu0 %v1059
        %1081 = vmatpush.msra.mxu0 %v1058
        %1082 = vmatpush.msra.mxu0 %v1057
        %1083 = vmatpush.msra.mxu0 %v1056
        %1084 = vmatpush.msra.mxu0 %v1055
        %1085 = vmatpush.msra.mxu0 %v1054
        %1086 = vmatmul.f32.gmra.mxu0 %v541
        %v1087 = vpop.f32.mrf.mxu0
        %v1088 = vadd.f32 0.0, %v1087
        %1089 = vdwg.mxu0
        %v1090 = vadd.f32 %v1052, %v1088
        %v1091 = vld [vmem:[%s12] sm:$0x1]
        %v1093 = vperm.slane %v1091, 0
        %v1095 = vadd.f32 %v1090, %v1093
        %1096 = vst [vmem:[%s533] sm:$0x3] %v1095
        %1097 = vst [vmem:[#allocation2] sm:$0x3] %v981
        %v1098 = vlaneseq
        %v1099 = vand.u32 %v1098, 127
        %vm1100 = vcmask 1041408
        %v1101 = vsel %vm1100, %v1095, -inf
        %1102 = vmax.xlane.f32.xlu0 %v1101
        %v1103 = vpop.xlane.xlu0 %1102
        %vm1104 = vcmp.eq.f32.partialorder %v1095, %v1103
        %v1105 = vsel %vm1104, %v1099, 128
        %v1106 = vsel %vm1100, %v1105, 2147483647
        %v1107 = vand.u32 %v1106, 65535
        %v1108 = vshra.s32 %v1106, 16
        %v1109 = vcvt.s32.f32 %v1107
        %v1110 = vcvt.s32.f32 %v1108
        %1111 = vmin.xlane.f32.xlu0 %v1110
        %v1112 = vpop.xlane.xlu0 %1111
        %vm1113 = vcmp.eq.f32.partialorder %v1110, %v1112
        %v1114 = vsel %vm1113, %v1109, inf
        %1115 = vmin.xlane.f32.xlu0 %v1114
        %v1116 = vpop.xlane.xlu0 %1115
        %v1117 = vcvt.f32.s32 %v1116
        %v1118 = vcvt.f32.s32 %v1112
        %v1119 = vshll.u32 %v1118, 16
        %v1120 = vadd.s32 %v1119, %v1117
        %vm1121 = vcmp.eq.s32.totalorder %v1099, %v1120
        %v1122 = vsel %vm1121, 1, 0
        %v1123 = vcvt.s32.f32 %v1122
        %1124 = vst [vmem:[#allocation3] sm:$0x3] %v1123
        %p1125 = scmp.lt.s32.totalorder %s36, 6
        %s1126 = scalar_select %p1125, %s36, 6
        %s1127 = smul.addr %s1126, 2
        %s1128 = scalar_lea.vmem %s13, %s1127
        // Predicated region
        $region101: #{seq2seq_forward.1} parent=67 // pred_check
          %p1129 = pneg %p311
        $region102: #{seq2seq_forward.1} parent=67 // pred_check_branch
          %1131 = sbr.rel (%p1129) target = $region104
        $region103: #{seq2seq_forward.1} parent=67 // pred_region
          _
        $region104: #{seq2seq_forward.1} parent=67 // pred_fallthru
          _
      $region68: #{seq2seq_forward.1} parent=5 // pred_fallthru
        _
      %p1132 = scmp.le.s32.totalorder 2, %s31
      // Predicated region
      $region105: #{seq2seq_forward.1} parent=5 // pred_check
        %p1133 = pneg %p1132
      $region106: #{seq2seq_forward.1} parent=5 // pred_check_branch
        %1135 = sbr.rel (%p1133) target = $region108
      $region107: #{seq2seq_forward.1} parent=5 // pred_region
        %s1136 = ssub.s32 %s31, 2
        // Predicated region
        $region109: #{seq2seq_forward.1} parent=107 // pred_check
          %p1137 = pneg %p317
        $region110: #{seq2seq_forward.1} parent=107 // pred_check_branch
          %1139 = sbr.rel (%p1137) target = $region112
        $region111: #{seq2seq_forward.1} parent=107 // pred_region
          %p1140 = scmp.lt.s32.totalorder %s37, 6
          %s1141 = scalar_select %p1140, %s37, 6
          %s1142 = smul.addr %s1141, 2
          %s1143 = scalar_lea.vmem %s13, %s1142
        $region112: #{seq2seq_forward.1} parent=107 // pred_fallthru
          _
      $region108: #{seq2seq_forward.1} parent=5 // pred_fallthru
        _
    $region6: #{seq2seq_forward.1} parent=1 // loop_footer
      %s35 = sadd.s32 1, %s31
    $region7: #{seq2seq_forward.1} parent=1 // loop_footer_branch
      %30 = sbr.rel target = $region3
    $region8: #{seq2seq_forward.1} parent=1 // loop_exit
      _
    %1144 = vsyncpa [#allocation7], 1
    %s1145 = scalar_lea.sflag [#allocation7], 1
    %1146 = vsyncpa %s1145, 1
    %1147 = vsyncpa [#allocation9], 1
    %1148 = vsyncpa [#allocation12], 1
    %1149 = vsyncpa [#allocation15], 1

</llo_original>
